<compile_context>
chip_gen: v6e
topology: v6e:2x2x1
jax: 0.10.0
libtpu: 0.0.40
codegen_flags: <defaults>
</compile_context>

<pallas_src>
import jax
import jax.numpy as jnp
from jax import lax
from jax.experimental import pallas as pl
from jax.experimental.pallas import tpu as pltpu


def gru_kernel(gi_r_ref, gi_z_ref, gi_n_ref, lens_ref,
               whh_r_ref, whh_z_ref, whh_n_ref, bhh_n_ref,
               last_ref):
    """Runs the full GRU time recurrence in one kernel invocation.

    gi_*_ref : (T, B, H) per-gate input projections (biases already folded
               for r/z; b_ih_n folded for n).
    lens_ref : (B, 1) int32 valid lengths.
    whh_*_ref: (H, H) per-gate recurrent weights (transposed, lane-aligned).
    bhh_n_ref: (1, H) recurrent bias of the n gate.
    last_ref : (B, H) output = hidden state at step lens[i]-1 per example.
    """
    T = gi_r_ref.shape[0]
    B, H = last_ref.shape

    # Hoist all loop-invariant loads out of the recurrence.
    w_r = whh_r_ref[...]
    w_z = whh_z_ref[...]
    w_n = whh_n_ref[...]
    b_n = bhh_n_ref[...]
    lens_m1 = lens_ref[...] - 1            # (B, 1) int32

    def step(t, carry):
        h, last = carry
        # Per-gate recurrent matmuls: each output starts at lane 0.
        gh_r = jnp.dot(h, w_r, preferred_element_type=jnp.float32)
        gh_z = jnp.dot(h, w_z, preferred_element_type=jnp.float32)
        gh_n = jnp.dot(h, w_n, preferred_element_type=jnp.float32)

        r = jax.nn.sigmoid(gi_r_ref[t] + gh_r)
        z = jax.nn.sigmoid(gi_z_ref[t] + gh_z)
        n = jnp.tanh(gi_n_ref[t] + r * (gh_n + b_n))
        h_new = n + z * (h - n)            # == (1-z)*n + z*h

        # Capture hidden[i, lens[i]-1, :].
        last_new = jnp.where(lens_m1 == t, h_new, last)
        return h_new, last_new

    h0 = jnp.zeros((B, H), jnp.float32)
    _, last = lax.fori_loop(0, T, step, (h0, h0), unroll=True)
    last_ref[...] = last.astype(last_ref.dtype)


def text_model_forward(x_ids, lens, params):
    """x_ids: (B, T) int32 token ids; lens: (B,) int32 valid lengths (1..T)."""
    emb_table = params["embed"]          # (n_tokens, E)
    wih = params["w_ih"]                 # (3H, E)  gates stacked r, z, n
    whh = params["w_hh"]                 # (3H, H)
    bih = params["b_ih"]                 # (3H,)
    bhh = params["b_hh"]                 # (3H,)
    wout = params["w_out"]               # (1, H)
    bout = params["b_out"]               # (1,)

    B, T = x_ids.shape
    E = emb_table.shape[1]
    H = whh.shape[1]

    # Embedding gather, produced directly in time-major order (T, B, E).
    emb_tm = jnp.take(emb_table, x_ids.T, axis=0).astype(jnp.float32)

    # Per-gate splits (PyTorch GRU layout: r, z, n along the 3H axis).
    w_ih_r, w_ih_z, w_ih_n = wih[:H], wih[H:2 * H], wih[2 * H:]
    w_hh_r, w_hh_z, w_hh_n = whh[:H], whh[H:2 * H], whh[2 * H:]
    b_ih_r, b_ih_z, b_ih_n = bih[:H], bih[H:2 * H], bih[2 * H:]
    b_hh_r, b_hh_z, b_hh_n = bhh[:H], bhh[H:2 * H], bhh[2 * H:]

    # Input projection hoisted out of the recurrence: one (T*B, E) x (E, H)
    # matmul per gate, with biases folded where legal.
    emb2d = emb_tm.reshape(T * B, E)
    gi_r = (emb2d @ w_ih_r.T + (b_ih_r + b_hh_r)).reshape(T, B, H)
    gi_z = (emb2d @ w_ih_z.T + (b_ih_z + b_hh_z)).reshape(T, B, H)
    gi_n = (emb2d @ w_ih_n.T + b_ih_n).reshape(T, B, H)

    lens2d = lens.reshape(B, 1).astype(jnp.int32)

    cost = pl.CostEstimate(
        flops=2 * T * B * 3 * H * H,
        transcendentals=3 * T * B * H,
        bytes_accessed=4 * (3 * T * B * H + 3 * H * H + H + B + B * H),
    )

    last = pl.pallas_call(
        gru_kernel,
        out_shape=jax.ShapeDtypeStruct((B, H), jnp.float32),
        in_specs=[pl.BlockSpec(memory_space=pltpu.MemorySpace.VMEM)] * 8,
        out_specs=pl.BlockSpec(memory_space=pltpu.MemorySpace.VMEM),
        cost_estimate=cost,
    )(gi_r.astype(jnp.float32), gi_z.astype(jnp.float32), gi_n.astype(jnp.float32),
      lens2d,
      w_hh_r.T.astype(jnp.float32), w_hh_z.T.astype(jnp.float32),
      w_hh_n.T.astype(jnp.float32), b_hh_n.reshape(1, H).astype(jnp.float32))

    # Final projection stays in XLA: lane-dense (B, H) kernel output instead of
    # a lane-width-1 masked store inside the kernel.
    return last @ wout.T + bout


def text_model_ref(x_ids, lens, params):
    """Pure-JAX reference mirroring the PyTorch forward."""
    emb = jnp.take(params["embed"], x_ids, axis=0)
    wih, whh = params["w_ih"], params["w_hh"]
    bih, bhh = params["b_ih"], params["b_hh"]
    B, T, _ = emb.shape
    H = whh.shape[1]
    h = jnp.zeros((B, H), jnp.float32)
    hiddens = []
    for t in range(T):
        gi = emb[:, t, :] @ wih.T + bih
        gh = h @ whh.T + bhh
        i_r, i_z, i_n = gi[:, :H], gi[:, H:2 * H], gi[:, 2 * H:]
        h_r, h_z, h_n = gh[:, :H], gh[:, H:2 * H], gh[:, 2 * H:]
        r = jax.nn.sigmoid(i_r + h_r)
        z = jax.nn.sigmoid(i_z + h_z)
        n = jnp.tanh(i_n + r * h_n)
        h = (1.0 - z) * n + z * h
        hiddens.append(h)
    hidden = jnp.stack(hiddens, axis=1)                      # (B, T, H)
    last = jnp.stack([hidden[i, lens[i] - 1, :] for i in range(B)])
    return last @ params["w_out"].T + params["b_out"]


if __name__ == "__main__":
    n_tokens, hidden_size, emb_dim = 50, 32, 16
    B, T = 2, 8

    key = jax.random.PRNGKey(0)
    ks = jax.random.split(key, 9)
    scale = 1.0 / jnp.sqrt(hidden_size)
    params = {
        "embed": jax.random.normal(ks[0], (n_tokens, emb_dim), jnp.float32) * 0.1,
        "w_ih": jax.random.uniform(ks[1], (3 * hidden_size, emb_dim),
                                   jnp.float32, -scale, scale),
        "w_hh": jax.random.uniform(ks[2], (3 * hidden_size, hidden_size),
                                   jnp.float32, -scale, scale),
        "b_ih": jax.random.uniform(ks[3], (3 * hidden_size,), jnp.float32, -scale, scale),
        "b_hh": jax.random.uniform(ks[4], (3 * hidden_size,), jnp.float32, -scale, scale),
        "w_out": jax.random.uniform(ks[5], (1, hidden_size), jnp.float32, -scale, scale),
        "b_out": jax.random.uniform(ks[6], (1,), jnp.float32, -scale, scale),
    }

    x_ids = jax.random.randint(ks[7], (B, T), 0, n_tokens, dtype=jnp.int32)
    lens = jnp.array([T, T - 3], dtype=jnp.int32)   # variable-length sequences

    out = text_model_forward(x_ids, lens, params)
    jax.block_until_ready(out)

    ref = text_model_ref(x_ids, lens, params)
    assert out.shape == (B, 1)
    assert jnp.allclose(out, ref, rtol=1e-3, atol=1e-3), (out, ref)

    print("KERNEL_OK")
</pallas_src>

<mosaic_0001>
module attributes {stable_mosaic.version = 11 : i64} {
  func.func @gru_kernel(%arg0: memref<8x2x32xf32, #tpu.memory_space<vmem>>, %arg1: memref<8x2x32xf32, #tpu.memory_space<vmem>>, %arg2: memref<8x2x32xf32, #tpu.memory_space<vmem>>, %arg3: memref<2x1xi32, #tpu.memory_space<vmem>>, %arg4: memref<32x32xf32, #tpu.memory_space<vmem>>, %arg5: memref<32x32xf32, #tpu.memory_space<vmem>>, %arg6: memref<32x32xf32, #tpu.memory_space<vmem>>, %arg7: memref<1x32xf32, #tpu.memory_space<vmem>>, %arg8: memref<2x32xf32, #tpu.memory_space<vmem>>) attributes {dimension_semantics = [], scalar_prefetch = 0 : i64, scratch_operands = 0 : i64, tpu.core_type = #tpu.core_type<tc>} {
    %c0 = arith.constant 0 : index
    %c0_0 = arith.constant 0 : index
    %0 = vector.load %arg4[%c0, %c0_0] : memref<32x32xf32, #tpu.memory_space<vmem>>, vector<32x32xf32>
    %c0_1 = arith.constant 0 : index
    %c0_2 = arith.constant 0 : index
    %1 = vector.load %arg5[%c0_1, %c0_2] : memref<32x32xf32, #tpu.memory_space<vmem>>, vector<32x32xf32>
    %c0_3 = arith.constant 0 : index
    %c0_4 = arith.constant 0 : index
    %2 = vector.load %arg6[%c0_3, %c0_4] : memref<32x32xf32, #tpu.memory_space<vmem>>, vector<32x32xf32>
    %c0_5 = arith.constant 0 : index
    %c0_6 = arith.constant 0 : index
    %3 = vector.load %arg7[%c0_5, %c0_6] : memref<1x32xf32, #tpu.memory_space<vmem>>, vector<1x32xf32>
    %c0_7 = arith.constant 0 : index
    %c0_8 = arith.constant 0 : index
    %4 = vector.load %arg3[%c0_7, %c0_8] : memref<2x1xi32, #tpu.memory_space<vmem>>, vector<2x1xi32>
    %c1_i32 = arith.constant 1 : i32
    %5 = vector.broadcast %c1_i32 : i32 to vector<2x1xi32>
    %6 = arith.subi %4, %5 : vector<2x1xi32>
    %cst = arith.constant 0.000000e+00 : f32
    %7 = vector.broadcast %cst : f32 to vector<2x32xf32>
    %c0_i32 = arith.constant 0 : i32
    %cst_9 = arith.constant dense<0.000000e+00> : vector<2x32xf32>
    %8 = tpu.matmul %7, %0, %cst_9 {dimension_numbers = #tpu.dot_dimension_numbers<[1], [0], [0], [1], [0, 0, 1, 1], [], []>} : vector<2x32xf32>, vector<32x32xf32>, vector<2x32xf32> -> vector<2x32xf32>
    %cst_10 = arith.constant dense<0.000000e+00> : vector<2x32xf32>
    %9 = tpu.matmul %7, %1, %cst_10 {dimension_numbers = #tpu.dot_dimension_numbers<[1], [0], [0], [1], [0, 0, 1, 1], [], []>} : vector<2x32xf32>, vector<32x32xf32>, vector<2x32xf32> -> vector<2x32xf32>
    %cst_11 = arith.constant dense<0.000000e+00> : vector<2x32xf32>
    %10 = tpu.matmul %7, %2, %cst_11 {dimension_numbers = #tpu.dot_dimension_numbers<[1], [0], [0], [1], [0, 0, 1, 1], [], []>} : vector<2x32xf32>, vector<32x32xf32>, vector<2x32xf32> -> vector<2x32xf32>
    %11 = arith.index_cast %c0_i32 : i32 to index
    %c0_12 = arith.constant 0 : index
    %c0_13 = arith.constant 0 : index
    %12 = vector.load %arg0[%11, %c0_12, %c0_13] : memref<8x2x32xf32, #tpu.memory_space<vmem>>, vector<1x2x32xf32>
    %13 = vector.shape_cast %12 : vector<1x2x32xf32> to vector<2x32xf32>
    %14 = arith.addf %13, %8 : vector<2x32xf32>
    %15 = arith.negf %14 : vector<2x32xf32>
    %16 = math.exp %15 : vector<2x32xf32>
    %cst_14 = arith.constant 1.000000e+00 : f32
    %17 = vector.broadcast %cst_14 : f32 to vector<2x32xf32>
    %18 = arith.addf %17, %16 : vector<2x32xf32>
    %19 = arith.divf %17, %18 : vector<2x32xf32>
    %20 = arith.index_cast %c0_i32 : i32 to index
    %c0_15 = arith.constant 0 : index
    %c0_16 = arith.constant 0 : index
    %21 = vector.load %arg1[%20, %c0_15, %c0_16] : memref<8x2x32xf32, #tpu.memory_space<vmem>>, vector<1x2x32xf32>
    %22 = vector.shape_cast %21 : vector<1x2x32xf32> to vector<2x32xf32>
    %23 = arith.addf %22, %9 : vector<2x32xf32>
    %24 = arith.negf %23 : vector<2x32xf32>
    %25 = math.exp %24 : vector<2x32xf32>
    %cst_17 = arith.constant 1.000000e+00 : f32
    %26 = vector.broadcast %cst_17 : f32 to vector<2x32xf32>
    %27 = arith.addf %26, %25 : vector<2x32xf32>
    %28 = arith.divf %26, %27 : vector<2x32xf32>
    %29 = arith.index_cast %c0_i32 : i32 to index
    %c0_18 = arith.constant 0 : index
    %c0_19 = arith.constant 0 : index
    %30 = vector.load %arg2[%29, %c0_18, %c0_19] : memref<8x2x32xf32, #tpu.memory_space<vmem>>, vector<1x2x32xf32>
    %31 = vector.shape_cast %30 : vector<1x2x32xf32> to vector<2x32xf32>
    %32 = vector.broadcast %3 : vector<1x32xf32> to vector<2x32xf32>
    %33 = arith.addf %10, %32 : vector<2x32xf32>
    %34 = arith.mulf %19, %33 : vector<2x32xf32>
    %35 = arith.addf %31, %34 : vector<2x32xf32>
    %36 = math.tanh %35 : vector<2x32xf32>
    %37 = arith.subf %7, %36 : vector<2x32xf32>
    %38 = arith.mulf %28, %37 : vector<2x32xf32>
    %39 = arith.addf %36, %38 : vector<2x32xf32>
    %40 = vector.broadcast %c0_i32 : i32 to vector<2x1xi32>
    %41 = arith.cmpi eq, %6, %40 : vector<2x1xi32>
    %42 = vector.shape_cast %41 : vector<2x1xi1> to vector<2x1xi1>
    %43 = vector.broadcast %42 : vector<2x1xi1> to vector<2x32xi1>
    %44 = arith.select %43, %39, %7 : vector<2x32xi1>, vector<2x32xf32>
    %c1_i32_20 = arith.constant 1 : i32
    %cst_21 = arith.constant dense<0.000000e+00> : vector<2x32xf32>
    %45 = tpu.matmul %39, %0, %cst_21 {dimension_numbers = #tpu.dot_dimension_numbers<[1], [0], [0], [1], [0, 0, 1, 1], [], []>} : vector<2x32xf32>, vector<32x32xf32>, vector<2x32xf32> -> vector<2x32xf32>
    %cst_22 = arith.constant dense<0.000000e+00> : vector<2x32xf32>
    %46 = tpu.matmul %39, %1, %cst_22 {dimension_numbers = #tpu.dot_dimension_numbers<[1], [0], [0], [1], [0, 0, 1, 1], [], []>} : vector<2x32xf32>, vector<32x32xf32>, vector<2x32xf32> -> vector<2x32xf32>
    %cst_23 = arith.constant dense<0.000000e+00> : vector<2x32xf32>
    %47 = tpu.matmul %39, %2, %cst_23 {dimension_numbers = #tpu.dot_dimension_numbers<[1], [0], [0], [1], [0, 0, 1, 1], [], []>} : vector<2x32xf32>, vector<32x32xf32>, vector<2x32xf32> -> vector<2x32xf32>
    %48 = arith.index_cast %c1_i32_20 : i32 to index
    %c0_24 = arith.constant 0 : index
    %c0_25 = arith.constant 0 : index
    %49 = vector.load %arg0[%48, %c0_24, %c0_25] : memref<8x2x32xf32, #tpu.memory_space<vmem>>, vector<1x2x32xf32>
    %50 = vector.shape_cast %49 : vector<1x2x32xf32> to vector<2x32xf32>
    %51 = arith.addf %50, %45 : vector<2x32xf32>
    %52 = arith.negf %51 : vector<2x32xf32>
    %53 = math.exp %52 : vector<2x32xf32>
    %cst_26 = arith.constant 1.000000e+00 : f32
    %54 = vector.broadcast %cst_26 : f32 to vector<2x32xf32>
    %55 = arith.addf %54, %53 : vector<2x32xf32>
    %56 = arith.divf %54, %55 : vector<2x32xf32>
    %57 = arith.index_cast %c1_i32_20 : i32 to index
    %c0_27 = arith.constant 0 : index
    %c0_28 = arith.constant 0 : index
    %58 = vector.load %arg1[%57, %c0_27, %c0_28] : memref<8x2x32xf32, #tpu.memory_space<vmem>>, vector<1x2x32xf32>
    %59 = vector.shape_cast %58 : vector<1x2x32xf32> to vector<2x32xf32>
    %60 = arith.addf %59, %46 : vector<2x32xf32>
    %61 = arith.negf %60 : vector<2x32xf32>
    %62 = math.exp %61 : vector<2x32xf32>
    %cst_29 = arith.constant 1.000000e+00 : f32
    %63 = vector.broadcast %cst_29 : f32 to vector<2x32xf32>
    %64 = arith.addf %63, %62 : vector<2x32xf32>
    %65 = arith.divf %63, %64 : vector<2x32xf32>
    %66 = arith.index_cast %c1_i32_20 : i32 to index
    %c0_30 = arith.constant 0 : index
    %c0_31 = arith.constant 0 : index
    %67 = vector.load %arg2[%66, %c0_30, %c0_31] : memref<8x2x32xf32, #tpu.memory_space<vmem>>, vector<1x2x32xf32>
    %68 = vector.shape_cast %67 : vector<1x2x32xf32> to vector<2x32xf32>
    %69 = vector.broadcast %3 : vector<1x32xf32> to vector<2x32xf32>
    %70 = arith.addf %47, %69 : vector<2x32xf32>
    %71 = arith.mulf %56, %70 : vector<2x32xf32>
    %72 = arith.addf %68, %71 : vector<2x32xf32>
    %73 = math.tanh %72 : vector<2x32xf32>
    %74 = arith.subf %39, %73 : vector<2x32xf32>
    %75 = arith.mulf %65, %74 : vector<2x32xf32>
    %76 = arith.addf %73, %75 : vector<2x32xf32>
    %77 = vector.broadcast %c1_i32_20 : i32 to vector<2x1xi32>
    %78 = arith.cmpi eq, %6, %77 : vector<2x1xi32>
    %79 = vector.shape_cast %78 : vector<2x1xi1> to vector<2x1xi1>
    %80 = vector.broadcast %79 : vector<2x1xi1> to vector<2x32xi1>
    %81 = arith.select %80, %76, %44 : vector<2x32xi1>, vector<2x32xf32>
    %c2_i32 = arith.constant 2 : i32
    %cst_32 = arith.constant dense<0.000000e+00> : vector<2x32xf32>
    %82 = tpu.matmul %76, %0, %cst_32 {dimension_numbers = #tpu.dot_dimension_numbers<[1], [0], [0], [1], [0, 0, 1, 1], [], []>} : vector<2x32xf32>, vector<32x32xf32>, vector<2x32xf32> -> vector<2x32xf32>
    %cst_33 = arith.constant dense<0.000000e+00> : vector<2x32xf32>
    %83 = tpu.matmul %76, %1, %cst_33 {dimension_numbers = #tpu.dot_dimension_numbers<[1], [0], [0], [1], [0, 0, 1, 1], [], []>} : vector<2x32xf32>, vector<32x32xf32>, vector<2x32xf32> -> vector<2x32xf32>
    %cst_34 = arith.constant dense<0.000000e+00> : vector<2x32xf32>
    %84 = tpu.matmul %76, %2, %cst_34 {dimension_numbers = #tpu.dot_dimension_numbers<[1], [0], [0], [1], [0, 0, 1, 1], [], []>} : vector<2x32xf32>, vector<32x32xf32>, vector<2x32xf32> -> vector<2x32xf32>
    %85 = arith.index_cast %c2_i32 : i32 to index
    %c0_35 = arith.constant 0 : index
    %c0_36 = arith.constant 0 : index
    %86 = vector.load %arg0[%85, %c0_35, %c0_36] : memref<8x2x32xf32, #tpu.memory_space<vmem>>, vector<1x2x32xf32>
    %87 = vector.shape_cast %86 : vector<1x2x32xf32> to vector<2x32xf32>
    %88 = arith.addf %87, %82 : vector<2x32xf32>
    %89 = arith.negf %88 : vector<2x32xf32>
    %90 = math.exp %89 : vector<2x32xf32>
    %cst_37 = arith.constant 1.000000e+00 : f32
    %91 = vector.broadcast %cst_37 : f32 to vector<2x32xf32>
    %92 = arith.addf %91, %90 : vector<2x32xf32>
    %93 = arith.divf %91, %92 : vector<2x32xf32>
    %94 = arith.index_cast %c2_i32 : i32 to index
    %c0_38 = arith.constant 0 : index
    %c0_39 = arith.constant 0 : index
    %95 = vector.load %arg1[%94, %c0_38, %c0_39] : memref<8x2x32xf32, #tpu.memory_space<vmem>>, vector<1x2x32xf32>
    %96 = vector.shape_cast %95 : vector<1x2x32xf32> to vector<2x32xf32>
    %97 = arith.addf %96, %83 : vector<2x32xf32>
    %98 = arith.negf %97 : vector<2x32xf32>
    %99 = math.exp %98 : vector<2x32xf32>
    %cst_40 = arith.constant 1.000000e+00 : f32
    %100 = vector.broadcast %cst_40 : f32 to vector<2x32xf32>
    %101 = arith.addf %100, %99 : vector<2x32xf32>
    %102 = arith.divf %100, %101 : vector<2x32xf32>
    %103 = arith.index_cast %c2_i32 : i32 to index
    %c0_41 = arith.constant 0 : index
    %c0_42 = arith.constant 0 : index
    %104 = vector.load %arg2[%103, %c0_41, %c0_42] : memref<8x2x32xf32, #tpu.memory_space<vmem>>, vector<1x2x32xf32>
    %105 = vector.shape_cast %104 : vector<1x2x32xf32> to vector<2x32xf32>
    %106 = vector.broadcast %3 : vector<1x32xf32> to vector<2x32xf32>
    %107 = arith.addf %84, %106 : vector<2x32xf32>
    %108 = arith.mulf %93, %107 : vector<2x32xf32>
    %109 = arith.addf %105, %108 : vector<2x32xf32>
    %110 = math.tanh %109 : vector<2x32xf32>
    %111 = arith.subf %76, %110 : vector<2x32xf32>
    %112 = arith.mulf %102, %111 : vector<2x32xf32>
    %113 = arith.addf %110, %112 : vector<2x32xf32>
    %114 = vector.broadcast %c2_i32 : i32 to vector<2x1xi32>
    %115 = arith.cmpi eq, %6, %114 : vector<2x1xi32>
    %116 = vector.shape_cast %115 : vector<2x1xi1> to vector<2x1xi1>
    %117 = vector.broadcast %116 : vector<2x1xi1> to vector<2x32xi1>
    %118 = arith.select %117, %113, %81 : vector<2x32xi1>, vector<2x32xf32>
    %c3_i32 = arith.constant 3 : i32
    %cst_43 = arith.constant dense<0.000000e+00> : vector<2x32xf32>
    %119 = tpu.matmul %113, %0, %cst_43 {dimension_numbers = #tpu.dot_dimension_numbers<[1], [0], [0], [1], [0, 0, 1, 1], [], []>} : vector<2x32xf32>, vector<32x32xf32>, vector<2x32xf32> -> vector<2x32xf32>
    %cst_44 = arith.constant dense<0.000000e+00> : vector<2x32xf32>
    %120 = tpu.matmul %113, %1, %cst_44 {dimension_numbers = #tpu.dot_dimension_numbers<[1], [0], [0], [1], [0, 0, 1, 1], [], []>} : vector<2x32xf32>, vector<32x32xf32>, vector<2x32xf32> -> vector<2x32xf32>
    %cst_45 = arith.constant dense<0.000000e+00> : vector<2x32xf32>
    %121 = tpu.matmul %113, %2, %cst_45 {dimension_numbers = #tpu.dot_dimension_numbers<[1], [0], [0], [1], [0, 0, 1, 1], [], []>} : vector<2x32xf32>, vector<32x32xf32>, vector<2x32xf32> -> vector<2x32xf32>
    %122 = arith.index_cast %c3_i32 : i32 to index
    %c0_46 = arith.constant 0 : index
    %c0_47 = arith.constant 0 : index
    %123 = vector.load %arg0[%122, %c0_46, %c0_47] : memref<8x2x32xf32, #tpu.memory_space<vmem>>, vector<1x2x32xf32>
    %124 = vector.shape_cast %123 : vector<1x2x32xf32> to vector<2x32xf32>
    %125 = arith.addf %124, %119 : vector<2x32xf32>
    %126 = arith.negf %125 : vector<2x32xf32>
    %127 = math.exp %126 : vector<2x32xf32>
    %cst_48 = arith.constant 1.000000e+00 : f32
    %128 = vector.broadcast %cst_48 : f32 to vector<2x32xf32>
    %129 = arith.addf %128, %127 : vector<2x32xf32>
    %130 = arith.divf %128, %129 : vector<2x32xf32>
    %131 = arith.index_cast %c3_i32 : i32 to index
    %c0_49 = arith.constant 0 : index
    %c0_50 = arith.constant 0 : index
    %132 = vector.load %arg1[%131, %c0_49, %c0_50] : memref<8x2x32xf32, #tpu.memory_space<vmem>>, vector<1x2x32xf32>
    %133 = vector.shape_cast %132 : vector<1x2x32xf32> to vector<2x32xf32>
    %134 = arith.addf %133, %120 : vector<2x32xf32>
    %135 = arith.negf %134 : vector<2x32xf32>
    %136 = math.exp %135 : vector<2x32xf32>
    %cst_51 = arith.constant 1.000000e+00 : f32
    %137 = vector.broadcast %cst_51 : f32 to vector<2x32xf32>
    %138 = arith.addf %137, %136 : vector<2x32xf32>
    %139 = arith.divf %137, %138 : vector<2x32xf32>
    %140 = arith.index_cast %c3_i32 : i32 to index
    %c0_52 = arith.constant 0 : index
    %c0_53 = arith.constant 0 : index
    %141 = vector.load %arg2[%140, %c0_52, %c0_53] : memref<8x2x32xf32, #tpu.memory_space<vmem>>, vector<1x2x32xf32>
    %142 = vector.shape_cast %141 : vector<1x2x32xf32> to vector<2x32xf32>
    %143 = vector.broadcast %3 : vector<1x32xf32> to vector<2x32xf32>
    %144 = arith.addf %121, %143 : vector<2x32xf32>
    %145 = arith.mulf %130, %144 : vector<2x32xf32>
    %146 = arith.addf %142, %145 : vector<2x32xf32>
    %147 = math.tanh %146 : vector<2x32xf32>
    %148 = arith.subf %113, %147 : vector<2x32xf32>
    %149 = arith.mulf %139, %148 : vector<2x32xf32>
    %150 = arith.addf %147, %149 : vector<2x32xf32>
    %151 = vector.broadcast %c3_i32 : i32 to vector<2x1xi32>
    %152 = arith.cmpi eq, %6, %151 : vector<2x1xi32>
    %153 = vector.shape_cast %152 : vector<2x1xi1> to vector<2x1xi1>
    %154 = vector.broadcast %153 : vector<2x1xi1> to vector<2x32xi1>
    %155 = arith.select %154, %150, %118 : vector<2x32xi1>, vector<2x32xf32>
    %c4_i32 = arith.constant 4 : i32
    %cst_54 = arith.constant dense<0.000000e+00> : vector<2x32xf32>
    %156 = tpu.matmul %150, %0, %cst_54 {dimension_numbers = #tpu.dot_dimension_numbers<[1], [0], [0], [1], [0, 0, 1, 1], [], []>} : vector<2x32xf32>, vector<32x32xf32>, vector<2x32xf32> -> vector<2x32xf32>
    %cst_55 = arith.constant dense<0.000000e+00> : vector<2x32xf32>
    %157 = tpu.matmul %150, %1, %cst_55 {dimension_numbers = #tpu.dot_dimension_numbers<[1], [0], [0], [1], [0, 0, 1, 1], [], []>} : vector<2x32xf32>, vector<32x32xf32>, vector<2x32xf32> -> vector<2x32xf32>
    %cst_56 = arith.constant dense<0.000000e+00> : vector<2x32xf32>
    %158 = tpu.matmul %150, %2, %cst_56 {dimension_numbers = #tpu.dot_dimension_numbers<[1], [0], [0], [1], [0, 0, 1, 1], [], []>} : vector<2x32xf32>, vector<32x32xf32>, vector<2x32xf32> -> vector<2x32xf32>
    %159 = arith.index_cast %c4_i32 : i32 to index
    %c0_57 = arith.constant 0 : index
    %c0_58 = arith.constant 0 : index
    %160 = vector.load %arg0[%159, %c0_57, %c0_58] : memref<8x2x32xf32, #tpu.memory_space<vmem>>, vector<1x2x32xf32>
    %161 = vector.shape_cast %160 : vector<1x2x32xf32> to vector<2x32xf32>
    %162 = arith.addf %161, %156 : vector<2x32xf32>
    %163 = arith.negf %162 : vector<2x32xf32>
    %164 = math.exp %163 : vector<2x32xf32>
    %cst_59 = arith.constant 1.000000e+00 : f32
    %165 = vector.broadcast %cst_59 : f32 to vector<2x32xf32>
    %166 = arith.addf %165, %164 : vector<2x32xf32>
    %167 = arith.divf %165, %166 : vector<2x32xf32>
    %168 = arith.index_cast %c4_i32 : i32 to index
    %c0_60 = arith.constant 0 : index
    %c0_61 = arith.constant 0 : index
    %169 = vector.load %arg1[%168, %c0_60, %c0_61] : memref<8x2x32xf32, #tpu.memory_space<vmem>>, vector<1x2x32xf32>
    %170 = vector.shape_cast %169 : vector<1x2x32xf32> to vector<2x32xf32>
    %171 = arith.addf %170, %157 : vector<2x32xf32>
    %172 = arith.negf %171 : vector<2x32xf32>
    %173 = math.exp %172 : vector<2x32xf32>
    %cst_62 = arith.constant 1.000000e+00 : f32
    %174 = vector.broadcast %cst_62 : f32 to vector<2x32xf32>
    %175 = arith.addf %174, %173 : vector<2x32xf32>
    %176 = arith.divf %174, %175 : vector<2x32xf32>
    %177 = arith.index_cast %c4_i32 : i32 to index
    %c0_63 = arith.constant 0 : index
    %c0_64 = arith.constant 0 : index
    %178 = vector.load %arg2[%177, %c0_63, %c0_64] : memref<8x2x32xf32, #tpu.memory_space<vmem>>, vector<1x2x32xf32>
    %179 = vector.shape_cast %178 : vector<1x2x32xf32> to vector<2x32xf32>
    %180 = vector.broadcast %3 : vector<1x32xf32> to vector<2x32xf32>
    %181 = arith.addf %158, %180 : vector<2x32xf32>
    %182 = arith.mulf %167, %181 : vector<2x32xf32>
    %183 = arith.addf %179, %182 : vector<2x32xf32>
    %184 = math.tanh %183 : vector<2x32xf32>
    %185 = arith.subf %150, %184 : vector<2x32xf32>
    %186 = arith.mulf %176, %185 : vector<2x32xf32>
    %187 = arith.addf %184, %186 : vector<2x32xf32>
    %188 = vector.broadcast %c4_i32 : i32 to vector<2x1xi32>
    %189 = arith.cmpi eq, %6, %188 : vector<2x1xi32>
    %190 = vector.shape_cast %189 : vector<2x1xi1> to vector<2x1xi1>
    %191 = vector.broadcast %190 : vector<2x1xi1> to vector<2x32xi1>
    %192 = arith.select %191, %187, %155 : vector<2x32xi1>, vector<2x32xf32>
    %c5_i32 = arith.constant 5 : i32
    %cst_65 = arith.constant dense<0.000000e+00> : vector<2x32xf32>
    %193 = tpu.matmul %187, %0, %cst_65 {dimension_numbers = #tpu.dot_dimension_numbers<[1], [0], [0], [1], [0, 0, 1, 1], [], []>} : vector<2x32xf32>, vector<32x32xf32>, vector<2x32xf32> -> vector<2x32xf32>
    %cst_66 = arith.constant dense<0.000000e+00> : vector<2x32xf32>
    %194 = tpu.matmul %187, %1, %cst_66 {dimension_numbers = #tpu.dot_dimension_numbers<[1], [0], [0], [1], [0, 0, 1, 1], [], []>} : vector<2x32xf32>, vector<32x32xf32>, vector<2x32xf32> -> vector<2x32xf32>
    %cst_67 = arith.constant dense<0.000000e+00> : vector<2x32xf32>
    %195 = tpu.matmul %187, %2, %cst_67 {dimension_numbers = #tpu.dot_dimension_numbers<[1], [0], [0], [1], [0, 0, 1, 1], [], []>} : vector<2x32xf32>, vector<32x32xf32>, vector<2x32xf32> -> vector<2x32xf32>
    %196 = arith.index_cast %c5_i32 : i32 to index
    %c0_68 = arith.constant 0 : index
    %c0_69 = arith.constant 0 : index
    %197 = vector.load %arg0[%196, %c0_68, %c0_69] : memref<8x2x32xf32, #tpu.memory_space<vmem>>, vector<1x2x32xf32>
    %198 = vector.shape_cast %197 : vector<1x2x32xf32> to vector<2x32xf32>
    %199 = arith.addf %198, %193 : vector<2x32xf32>
    %200 = arith.negf %199 : vector<2x32xf32>
    %201 = math.exp %200 : vector<2x32xf32>
    %cst_70 = arith.constant 1.000000e+00 : f32
    %202 = vector.broadcast %cst_70 : f32 to vector<2x32xf32>
    %203 = arith.addf %202, %201 : vector<2x32xf32>
    %204 = arith.divf %202, %203 : vector<2x32xf32>
    %205 = arith.index_cast %c5_i32 : i32 to index
    %c0_71 = arith.constant 0 : index
    %c0_72 = arith.constant 0 : index
    %206 = vector.load %arg1[%205, %c0_71, %c0_72] : memref<8x2x32xf32, #tpu.memory_space<vmem>>, vector<1x2x32xf32>
    %207 = vector.shape_cast %206 : vector<1x2x32xf32> to vector<2x32xf32>
    %208 = arith.addf %207, %194 : vector<2x32xf32>
    %209 = arith.negf %208 : vector<2x32xf32>
    %210 = math.exp %209 : vector<2x32xf32>
    %cst_73 = arith.constant 1.000000e+00 : f32
    %211 = vector.broadcast %cst_73 : f32 to vector<2x32xf32>
    %212 = arith.addf %211, %210 : vector<2x32xf32>
    %213 = arith.divf %211, %212 : vector<2x32xf32>
    %214 = arith.index_cast %c5_i32 : i32 to index
    %c0_74 = arith.constant 0 : index
    %c0_75 = arith.constant 0 : index
    %215 = vector.load %arg2[%214, %c0_74, %c0_75] : memref<8x2x32xf32, #tpu.memory_space<vmem>>, vector<1x2x32xf32>
    %216 = vector.shape_cast %215 : vector<1x2x32xf32> to vector<2x32xf32>
    %217 = vector.broadcast %3 : vector<1x32xf32> to vector<2x32xf32>
    %218 = arith.addf %195, %217 : vector<2x32xf32>
    %219 = arith.mulf %204, %218 : vector<2x32xf32>
    %220 = arith.addf %216, %219 : vector<2x32xf32>
    %221 = math.tanh %220 : vector<2x32xf32>
    %222 = arith.subf %187, %221 : vector<2x32xf32>
    %223 = arith.mulf %213, %222 : vector<2x32xf32>
    %224 = arith.addf %221, %223 : vector<2x32xf32>
    %225 = vector.broadcast %c5_i32 : i32 to vector<2x1xi32>
    %226 = arith.cmpi eq, %6, %225 : vector<2x1xi32>
    %227 = vector.shape_cast %226 : vector<2x1xi1> to vector<2x1xi1>
    %228 = vector.broadcast %227 : vector<2x1xi1> to vector<2x32xi1>
    %229 = arith.select %228, %224, %192 : vector<2x32xi1>, vector<2x32xf32>
    %c6_i32 = arith.constant 6 : i32
    %cst_76 = arith.constant dense<0.000000e+00> : vector<2x32xf32>
    %230 = tpu.matmul %224, %0, %cst_76 {dimension_numbers = #tpu.dot_dimension_numbers<[1], [0], [0], [1], [0, 0, 1, 1], [], []>} : vector<2x32xf32>, vector<32x32xf32>, vector<2x32xf32> -> vector<2x32xf32>
    %cst_77 = arith.constant dense<0.000000e+00> : vector<2x32xf32>
    %231 = tpu.matmul %224, %1, %cst_77 {dimension_numbers = #tpu.dot_dimension_numbers<[1], [0], [0], [1], [0, 0, 1, 1], [], []>} : vector<2x32xf32>, vector<32x32xf32>, vector<2x32xf32> -> vector<2x32xf32>
    %cst_78 = arith.constant dense<0.000000e+00> : vector<2x32xf32>
    %232 = tpu.matmul %224, %2, %cst_78 {dimension_numbers = #tpu.dot_dimension_numbers<[1], [0], [0], [1], [0, 0, 1, 1], [], []>} : vector<2x32xf32>, vector<32x32xf32>, vector<2x32xf32> -> vector<2x32xf32>
    %233 = arith.index_cast %c6_i32 : i32 to index
    %c0_79 = arith.constant 0 : index
    %c0_80 = arith.constant 0 : index
    %234 = vector.load %arg0[%233, %c0_79, %c0_80] : memref<8x2x32xf32, #tpu.memory_space<vmem>>, vector<1x2x32xf32>
    %235 = vector.shape_cast %234 : vector<1x2x32xf32> to vector<2x32xf32>
    %236 = arith.addf %235, %230 : vector<2x32xf32>
    %237 = arith.negf %236 : vector<2x32xf32>
    %238 = math.exp %237 : vector<2x32xf32>
    %cst_81 = arith.constant 1.000000e+00 : f32
    %239 = vector.broadcast %cst_81 : f32 to vector<2x32xf32>
    %240 = arith.addf %239, %238 : vector<2x32xf32>
    %241 = arith.divf %239, %240 : vector<2x32xf32>
    %242 = arith.index_cast %c6_i32 : i32 to index
    %c0_82 = arith.constant 0 : index
    %c0_83 = arith.constant 0 : index
    %243 = vector.load %arg1[%242, %c0_82, %c0_83] : memref<8x2x32xf32, #tpu.memory_space<vmem>>, vector<1x2x32xf32>
    %244 = vector.shape_cast %243 : vector<1x2x32xf32> to vector<2x32xf32>
    %245 = arith.addf %244, %231 : vector<2x32xf32>
    %246 = arith.negf %245 : vector<2x32xf32>
    %247 = math.exp %246 : vector<2x32xf32>
    %cst_84 = arith.constant 1.000000e+00 : f32
    %248 = vector.broadcast %cst_84 : f32 to vector<2x32xf32>
    %249 = arith.addf %248, %247 : vector<2x32xf32>
    %250 = arith.divf %248, %249 : vector<2x32xf32>
    %251 = arith.index_cast %c6_i32 : i32 to index
    %c0_85 = arith.constant 0 : index
    %c0_86 = arith.constant 0 : index
    %252 = vector.load %arg2[%251, %c0_85, %c0_86] : memref<8x2x32xf32, #tpu.memory_space<vmem>>, vector<1x2x32xf32>
    %253 = vector.shape_cast %252 : vector<1x2x32xf32> to vector<2x32xf32>
    %254 = vector.broadcast %3 : vector<1x32xf32> to vector<2x32xf32>
    %255 = arith.addf %232, %254 : vector<2x32xf32>
    %256 = arith.mulf %241, %255 : vector<2x32xf32>
    %257 = arith.addf %253, %256 : vector<2x32xf32>
    %258 = math.tanh %257 : vector<2x32xf32>
    %259 = arith.subf %224, %258 : vector<2x32xf32>
    %260 = arith.mulf %250, %259 : vector<2x32xf32>
    %261 = arith.addf %258, %260 : vector<2x32xf32>
    %262 = vector.broadcast %c6_i32 : i32 to vector<2x1xi32>
    %263 = arith.cmpi eq, %6, %262 : vector<2x1xi32>
    %264 = vector.shape_cast %263 : vector<2x1xi1> to vector<2x1xi1>
    %265 = vector.broadcast %264 : vector<2x1xi1> to vector<2x32xi1>
    %266 = arith.select %265, %261, %229 : vector<2x32xi1>, vector<2x32xf32>
    %c7_i32 = arith.constant 7 : i32
    %cst_87 = arith.constant dense<0.000000e+00> : vector<2x32xf32>
    %267 = tpu.matmul %261, %0, %cst_87 {dimension_numbers = #tpu.dot_dimension_numbers<[1], [0], [0], [1], [0, 0, 1, 1], [], []>} : vector<2x32xf32>, vector<32x32xf32>, vector<2x32xf32> -> vector<2x32xf32>
    %cst_88 = arith.constant dense<0.000000e+00> : vector<2x32xf32>
    %268 = tpu.matmul %261, %1, %cst_88 {dimension_numbers = #tpu.dot_dimension_numbers<[1], [0], [0], [1], [0, 0, 1, 1], [], []>} : vector<2x32xf32>, vector<32x32xf32>, vector<2x32xf32> -> vector<2x32xf32>
    %cst_89 = arith.constant dense<0.000000e+00> : vector<2x32xf32>
    %269 = tpu.matmul %261, %2, %cst_89 {dimension_numbers = #tpu.dot_dimension_numbers<[1], [0], [0], [1], [0, 0, 1, 1], [], []>} : vector<2x32xf32>, vector<32x32xf32>, vector<2x32xf32> -> vector<2x32xf32>
    %270 = arith.index_cast %c7_i32 : i32 to index
    %c0_90 = arith.constant 0 : index
    %c0_91 = arith.constant 0 : index
    %271 = vector.load %arg0[%270, %c0_90, %c0_91] : memref<8x2x32xf32, #tpu.memory_space<vmem>>, vector<1x2x32xf32>
    %272 = vector.shape_cast %271 : vector<1x2x32xf32> to vector<2x32xf32>
    %273 = arith.addf %272, %267 : vector<2x32xf32>
    %274 = arith.negf %273 : vector<2x32xf32>
    %275 = math.exp %274 : vector<2x32xf32>
    %cst_92 = arith.constant 1.000000e+00 : f32
    %276 = vector.broadcast %cst_92 : f32 to vector<2x32xf32>
    %277 = arith.addf %276, %275 : vector<2x32xf32>
    %278 = arith.divf %276, %277 : vector<2x32xf32>
    %279 = arith.index_cast %c7_i32 : i32 to index
    %c0_93 = arith.constant 0 : index
    %c0_94 = arith.constant 0 : index
    %280 = vector.load %arg1[%279, %c0_93, %c0_94] : memref<8x2x32xf32, #tpu.memory_space<vmem>>, vector<1x2x32xf32>
    %281 = vector.shape_cast %280 : vector<1x2x32xf32> to vector<2x32xf32>
    %282 = arith.addf %281, %268 : vector<2x32xf32>
    %283 = arith.negf %282 : vector<2x32xf32>
    %284 = math.exp %283 : vector<2x32xf32>
    %cst_95 = arith.constant 1.000000e+00 : f32
    %285 = vector.broadcast %cst_95 : f32 to vector<2x32xf32>
    %286 = arith.addf %285, %284 : vector<2x32xf32>
    %287 = arith.divf %285, %286 : vector<2x32xf32>
    %288 = arith.index_cast %c7_i32 : i32 to index
    %c0_96 = arith.constant 0 : index
    %c0_97 = arith.constant 0 : index
    %289 = vector.load %arg2[%288, %c0_96, %c0_97] : memref<8x2x32xf32, #tpu.memory_space<vmem>>, vector<1x2x32xf32>
    %290 = vector.shape_cast %289 : vector<1x2x32xf32> to vector<2x32xf32>
    %291 = vector.broadcast %3 : vector<1x32xf32> to vector<2x32xf32>
    %292 = arith.addf %269, %291 : vector<2x32xf32>
    %293 = arith.mulf %278, %292 : vector<2x32xf32>
    %294 = arith.addf %290, %293 : vector<2x32xf32>
    %295 = math.tanh %294 : vector<2x32xf32>
    %296 = arith.subf %261, %295 : vector<2x32xf32>
    %297 = arith.mulf %287, %296 : vector<2x32xf32>
    %298 = arith.addf %295, %297 : vector<2x32xf32>
    %299 = vector.broadcast %c7_i32 : i32 to vector<2x1xi32>
    %300 = arith.cmpi eq, %6, %299 : vector<2x1xi32>
    %301 = vector.shape_cast %300 : vector<2x1xi1> to vector<2x1xi1>
    %302 = vector.broadcast %301 : vector<2x1xi1> to vector<2x32xi1>
    %303 = arith.select %302, %298, %266 : vector<2x32xi1>, vector<2x32xf32>
    %c8_i32 = arith.constant 8 : i32
    %c0_98 = arith.constant 0 : index
    %c0_99 = arith.constant 0 : index
    %304 = vector.load %arg8[%c0_98, %c0_99] : memref<2x32xf32, #tpu.memory_space<vmem>>, vector<2x32xf32>
    tpu.vector_store %arg8[%c0_98, %c0_99], %303 {strides = array<i32>} : memref<2x32xf32, #tpu.memory_space<vmem>>, vector<2x32xf32>,
    return
  }
}

</mosaic_0001>

<llo_original>
// kernel: tpu_custom_call.1
$region0: #{tpu_custom_call.1}
  #allocation0 [shape = 'u32[]', space=smem, size = 0x4, offset = 0x4, fixed_abs, tag = 'smem constant byte address 0x4 - core index']
  #allocation1 [shape = 'u32[144,128]{1,0:T(1,128)}', space=vmem, size = 0x12000, scoped, tag = 'internal scratch']
  %s0 = inlined_call_operand.hbm [shape: f32[8,2,32], index: 0, kind: input, shape index: {}]
  %s1 = inlined_call_operand.hbm [shape: f32[8,2,32], index: 1, kind: input, shape index: {}]
  %s2 = inlined_call_operand.hbm [shape: f32[8,2,32], index: 2, kind: input, shape index: {}]
  %s3 = inlined_call_operand.vmem [shape: s32[2,1], index: 3, kind: input, shape index: {}]
  %s4 = inlined_call_operand.hbm [shape: f32[32,32], index: 4, kind: input, shape index: {}]
  %s5 = inlined_call_operand.hbm [shape: f32[32,32], index: 5, kind: input, shape index: {}]
  %s6 = inlined_call_operand.hbm [shape: f32[32,32], index: 6, kind: input, shape index: {}]
  %s7 = inlined_call_operand.vmem [shape: f32[1,32], index: 7, kind: input, shape index: {}]
  %s8 = inlined_call_operand.hbm [shape: f32[2,32], index: 8, kind: output, shape index: {}]
  %s9 = sld [smem:[#allocation0]]
  $region66: #{tpu_custom_call.1} parent=0
    _
  %s11 = ssub.s32 1, %s9
  %s12 = scalar_select 0, %s11, %s9
  $region1: #{tpu_custom_call.1} parent=0
    #allocation2 [shape = 'u8[8192]{0}', space=vmem, size = 0x2000, scoped, tag = 'input window, operand 0, single buffered']
    #allocation3 [shape = 's32[1]{0}', space=sflag, size = 0x4, scoped, tag = 'scoped memory for tpu_custom_call.1']
    #allocation4 [shape = 's32[1]{0}', space=sflag, size = 0x4, scoped, tag = 'scoped memory for tpu_custom_call.1']
    #allocation5 [shape = 'u8[8192]{0}', space=vmem, size = 0x2000, scoped, tag = 'input window, operand 1, single buffered']
    #allocation6 [shape = 's32[1]{0}', space=sflag, size = 0x4, scoped, tag = 'scoped memory for tpu_custom_call.1']
    #allocation7 [shape = 'u8[8192]{0}', space=vmem, size = 0x2000, scoped, tag = 'input window, operand 2, single buffered']
    #allocation8 [shape = 'u8[16384]{0}', space=vmem, size = 0x4000, scoped, tag = 'input window, operand 4, single buffered']
    #allocation9 [shape = 's32[1]{0}', space=sflag, size = 0x4, scoped, tag = 'scoped memory for tpu_custom_call.1']
    #allocation10 [shape = 'u8[16384]{0}', space=vmem, size = 0x4000, scoped, tag = 'input window, operand 5, single buffered']
    #allocation11 [shape = 'u8[16384]{0}', space=vmem, size = 0x4000, scoped, tag = 'input window, operand 6, single buffered']
    #allocation12 [shape = 's32[1]{0}', space=sflag, size = 0x4, scoped, tag = 'scoped memory for tpu_custom_call.1']
    #allocation13 [shape = 'u8[1024]{0}', space=vmem, size = 0x400, scoped, tag = 'output window, operand 0, single buffered']
    %13 = vsyncpa [#allocation3], 0
    %14 = vsyncpa [#allocation6], 0
    %15 = vsyncpa [#allocation9], 0
    %16 = vsyncpa [#allocation12], 0
    %17 = vsyncpa [#allocation4], 0
    // Predicated region
    $region2: #{tpu_custom_call.1} parent=1 // pred_check
      _
    $region3: #{tpu_custom_call.1} parent=1 // pred_check_branch
      %19 = sbr.rel (0) target = $region5
    $region4: #{tpu_custom_call.1} parent=1 // pred_region
      %s21 = ssub.s32 256, 256
      %22 = vsyncadd [#allocation3], %s21
      %s23 = sshll.u32 [#allocation2], 4
      %s24 = int_to_ptr.vmem [resolvable:$true] %s23
      %29 = dma.hbm_to_vmem [thread:$0]  %s0, 256, %s24, [#allocation3], 32, 32, 2
    $region5: #{tpu_custom_call.1} parent=1 // pred_fallthru
      _
    // Predicated region
    $region6: #{tpu_custom_call.1} parent=1 // pred_check
      _
    $region7: #{tpu_custom_call.1} parent=1 // pred_check_branch
      %31 = sbr.rel (0) target = $region9
    $region8: #{tpu_custom_call.1} parent=1 // pred_region
      %s33 = ssub.s32 256, 256
      %34 = vsyncadd [#allocation6], %s33
      %s35 = sshll.u32 [#allocation5], 4
      %s36 = int_to_ptr.vmem [resolvable:$true] %s35
      %41 = dma.hbm_to_vmem [thread:$0]  %s1, 256, %s36, [#allocation6], 32, 32, 2
    $region9: #{tpu_custom_call.1} parent=1 // pred_fallthru
      _
    // Predicated region
    $region10: #{tpu_custom_call.1} parent=1 // pred_check
      _
    $region11: #{tpu_custom_call.1} parent=1 // pred_check_branch
      %43 = sbr.rel (0) target = $region13
    $region12: #{tpu_custom_call.1} parent=1 // pred_region
      %s45 = ssub.s32 256, 256
      %46 = vsyncadd [#allocation6], %s45
      %s47 = sshll.u32 [#allocation7], 4
      %s48 = int_to_ptr.vmem [resolvable:$true] %s47
      %53 = dma.hbm_to_vmem [thread:$0]  %s2, 256, %s48, [#allocation6], 32, 32, 2
    $region13: #{tpu_custom_call.1} parent=1 // pred_fallthru
      _
    // Predicated region
    $region14: #{tpu_custom_call.1} parent=1 // pred_check
      _
    $region15: #{tpu_custom_call.1} parent=1 // pred_check_branch
      %55 = sbr.rel (0) target = $region17
    $region16: #{tpu_custom_call.1} parent=1 // pred_region
      _
    $region17: #{tpu_custom_call.1} parent=1 // pred_fallthru
      _
    // Predicated region
    $region18: #{tpu_custom_call.1} parent=1 // pred_check
      _
    $region19: #{tpu_custom_call.1} parent=1 // pred_check_branch
      %57 = sbr.rel (0) target = $region21
    $region20: #{tpu_custom_call.1} parent=1 // pred_region
      %s59 = ssub.s32 512, 512
      %60 = vsyncadd [#allocation9], %s59
      %s61 = sshll.u32 [#allocation8], 4
      %s62 = int_to_ptr.vmem [resolvable:$true] %s61
      %67 = dma.hbm_to_vmem [thread:$0]  %s4, 512, %s62, [#allocation9], 128, 128, 8
    $region21: #{tpu_custom_call.1} parent=1 // pred_fallthru
      _
    // Predicated region
    $region22: #{tpu_custom_call.1} parent=1 // pred_check
      _
    $region23: #{tpu_custom_call.1} parent=1 // pred_check_branch
      %69 = sbr.rel (0) target = $region25
    $region24: #{tpu_custom_call.1} parent=1 // pred_region
      %s71 = ssub.s32 512, 512
      %72 = vsyncadd [#allocation9], %s71
      %s73 = sshll.u32 [#allocation10], 4
      %s74 = int_to_ptr.vmem [resolvable:$true] %s73
      %79 = dma.hbm_to_vmem [thread:$0]  %s5, 512, %s74, [#allocation9], 128, 128, 8
    $region25: #{tpu_custom_call.1} parent=1 // pred_fallthru
      _
    // Predicated region
    $region26: #{tpu_custom_call.1} parent=1 // pred_check
      _
    $region27: #{tpu_custom_call.1} parent=1 // pred_check_branch
      %81 = sbr.rel (0) target = $region29
    $region28: #{tpu_custom_call.1} parent=1 // pred_region
      %s83 = ssub.s32 512, 512
      %84 = vsyncadd [#allocation12], %s83
      %s85 = sshll.u32 [#allocation11], 4
      %s86 = int_to_ptr.vmem [resolvable:$true] %s85
      %91 = dma.hbm_to_vmem [thread:$0]  %s6, 512, %s86, [#allocation12], 128, 128, 8
    $region29: #{tpu_custom_call.1} parent=1 // pred_fallthru
      _
    // Predicated region
    $region30: #{tpu_custom_call.1} parent=1 // pred_check
      _
    $region31: #{tpu_custom_call.1} parent=1 // pred_check_branch
      %93 = sbr.rel (0) target = $region33
    $region32: #{tpu_custom_call.1} parent=1 // pred_region
      _
    $region33: #{tpu_custom_call.1} parent=1 // pred_fallthru
      _
    // Predicated region
    $region34: #{tpu_custom_call.1} parent=1 // pred_check
      _
    $region35: #{tpu_custom_call.1} parent=1 // pred_check_branch
      %95 = sbr.rel (0) target = $region37
    $region36: #{tpu_custom_call.1} parent=1 // pred_region
      %96 = dma.done [#allocation3], 256
    $region37: #{tpu_custom_call.1} parent=1 // pred_fallthru
      _
    // Predicated region
    $region38: #{tpu_custom_call.1} parent=1 // pred_check
      _
    $region39: #{tpu_custom_call.1} parent=1 // pred_check_branch
      %98 = sbr.rel (0) target = $region41
    $region40: #{tpu_custom_call.1} parent=1 // pred_region
      %99 = dma.done [#allocation6], 256
    $region41: #{tpu_custom_call.1} parent=1 // pred_fallthru
      _
    // Predicated region
    $region42: #{tpu_custom_call.1} parent=1 // pred_check
      _
    $region43: #{tpu_custom_call.1} parent=1 // pred_check_branch
      %101 = sbr.rel (0) target = $region45
    $region44: #{tpu_custom_call.1} parent=1 // pred_region
      %102 = dma.done [#allocation6], 256
    $region45: #{tpu_custom_call.1} parent=1 // pred_fallthru
      _
    // Predicated region
    $region46: #{tpu_custom_call.1} parent=1 // pred_check
      _
    $region47: #{tpu_custom_call.1} parent=1 // pred_check_branch
      %104 = sbr.rel (0) target = $region49
    $region48: #{tpu_custom_call.1} parent=1 // pred_region
      %105 = dma.done [#allocation9], 512
    $region49: #{tpu_custom_call.1} parent=1 // pred_fallthru
      _
    // Predicated region
    $region50: #{tpu_custom_call.1} parent=1 // pred_check
      _
    $region51: #{tpu_custom_call.1} parent=1 // pred_check_branch
      %107 = sbr.rel (0) target = $region53
    $region52: #{tpu_custom_call.1} parent=1 // pred_region
      %108 = dma.done [#allocation9], 512
    $region53: #{tpu_custom_call.1} parent=1 // pred_fallthru
      _
    // Predicated region
    $region54: #{tpu_custom_call.1} parent=1 // pred_check
      _
    $region55: #{tpu_custom_call.1} parent=1 // pred_check_branch
      %110 = sbr.rel (0) target = $region57
    $region56: #{tpu_custom_call.1} parent=1 // pred_region
      %111 = dma.done [#allocation12], 512
    $region57: #{tpu_custom_call.1} parent=1 // pred_fallthru
      _
    %v112 = vld [vmem:[#allocation8] sm:$0xff]
    %v113 = vld [vmem:[#allocation8 + $0x8] sm:$0xff]
    %v114 = vld [vmem:[#allocation8 + $0x10] sm:$0xff]
    %v115 = vld [vmem:[#allocation8 + $0x18] sm:$0xff]
    %v116 = vld [vmem:[#allocation10] sm:$0xff]
    %v117 = vld [vmem:[#allocation10 + $0x8] sm:$0xff]
    %v118 = vld [vmem:[#allocation10 + $0x10] sm:$0xff]
    %v119 = vld [vmem:[#allocation10 + $0x18] sm:$0xff]
    %v120 = vld [vmem:[#allocation11] sm:$0xff]
    %v121 = vld [vmem:[#allocation11 + $0x8] sm:$0xff]
    %v122 = vld [vmem:[#allocation11 + $0x10] sm:$0xff]
    %v123 = vld [vmem:[#allocation11 + $0x18] sm:$0xff]
    %v124 = vld [vmem:[%s7] sm:$0x1]
    %v125 = vld [vmem:[%s3] sm:$0x3]
    %v126 = vsub.s32 %v125, 1
    %vm127 = vcmask 261120
    %v129 = vsel %vm127, 0.0, 0
    %131 = vmatprep.subr.mxu0 0.0
    %132 = vmatpush1.msra.mxu0 0.0
    %133 = vmatprep.subr.mxu0 0.0
    %134 = vmatpush1.msra.mxu0 0.0
    %135 = vmatprep.subr.mxu0 0.0
    %136 = vmatpush1.msra.mxu0 0.0
    %137 = vmatprep.subr.mxu0 0.0
    %138 = vmatpush1.msra.mxu0 0.0
    %139 = vmatprep.subr.mxu0 0.0
    %140 = vmatpush1.msra.mxu0 0.0
    %141 = vmatprep.subr.mxu0 0.0
    %142 = vmatpush1.msra.mxu0 0.0
    %143 = vmatprep.subr.mxu0 0.0
    %144 = vmatpush1.msra.mxu0 0.0
    %145 = vmatprep.subr.mxu0 0.0
    %146 = vmatpush1.msra.mxu0 0.0
    %147 = vmatprep.subr.mxu0 0.0
    %148 = vmatpush1.msra.mxu0 0.0
    %149 = vmatprep.subr.mxu0 0.0
    %150 = vmatpush1.msra.mxu0 0.0
    %151 = vmatprep.subr.mxu0 0.0
    %152 = vmatpush1.msra.mxu0 0.0
    %153 = vmatprep.subr.mxu0 0.0
    %154 = vmatpush1.msra.mxu0 0.0
    %155 = vmatprep.subr.mxu0 0.0
    %156 = vmatpush1.msra.mxu0 %v115
    %157 = vmatprep.subr.mxu0 0.0
    %158 = vmatpush1.msra.mxu0 %v114
    %159 = vmatprep.subr.mxu0 0.0
    %160 = vmatpush1.msra.mxu0 %v113
    %161 = vmatprep.subr.mxu0 0.0
    %162 = vmatpush1.msra.mxu0 %v112
    %163 = vmatprep.subr.mxu0 0.0
    %164 = vmatpush2.msra.mxu0 0.0
    %165 = vmatprep.subr.mxu0 0.0
    %166 = vmatpush2.msra.mxu0 0.0
    %167 = vmatprep.subr.mxu0 0.0
    %168 = vmatpush2.msra.mxu0 0.0
    %169 = vmatprep.subr.mxu0 0.0
    %170 = vmatpush2.msra.mxu0 0.0
    %171 = vmatprep.subr.mxu0 0.0
    %172 = vmatpush2.msra.mxu0 0.0
    %173 = vmatprep.subr.mxu0 0.0
    %174 = vmatpush2.msra.mxu0 0.0
    %175 = vmatprep.subr.mxu0 0.0
    %176 = vmatpush2.msra.mxu0 0.0
    %177 = vmatprep.subr.mxu0 0.0
    %178 = vmatpush2.msra.mxu0 0.0
    %179 = vmatprep.subr.mxu0 0.0
    %180 = vmatpush2.msra.mxu0 0.0
    %181 = vmatprep.subr.mxu0 0.0
    %182 = vmatpush2.msra.mxu0 0.0
    %183 = vmatprep.subr.mxu0 0.0
    %184 = vmatpush2.msra.mxu0 0.0
    %185 = vmatprep.subr.mxu0 0.0
    %186 = vmatpush2.msra.mxu0 0.0
    %187 = vmatprep.subr.mxu0 0.0
    %188 = vmatpush2.msra.mxu0 0.0
    %189 = vmatprep.subr.mxu0 0.0
    %190 = vmatpush2.msra.mxu0 0.0
    %191 = vmatprep.subr.mxu0 0.0
    %192 = vmatpush2.msra.mxu0 0.0
    %193 = vmatprep.subr.mxu0 0.0
    %194 = vmatpush2.msra.mxu0 0.0
    %195 = vmatprep.mubr.f32.mxu0 0.0
    %196 = vmatmul.mubr.f32.gmra.mxu0 %v129
    %v197 = vpop.f32.mrf.mxu0
    %v198 = vadd.f32 0.0, %v197
    %v199 = vpop.f32.mrf.mxu0
    %200 = vdwg.mxu0
    %201 = vmatprep.subr.mxu0 0.0
    %202 = vmatpush1.msra.mxu0 0.0
    %203 = vmatprep.subr.mxu0 0.0
    %204 = vmatpush1.msra.mxu0 0.0
    %205 = vmatprep.subr.mxu0 0.0
    %206 = vmatpush1.msra.mxu0 0.0
    %207 = vmatprep.subr.mxu0 0.0
    %208 = vmatpush1.msra.mxu0 0.0
    %209 = vmatprep.subr.mxu0 0.0
    %210 = vmatpush1.msra.mxu0 0.0
    %211 = vmatprep.subr.mxu0 0.0
    %212 = vmatpush1.msra.mxu0 0.0
    %213 = vmatprep.subr.mxu0 0.0
    %214 = vmatpush1.msra.mxu0 0.0
    %215 = vmatprep.subr.mxu0 0.0
    %216 = vmatpush1.msra.mxu0 0.0
    %217 = vmatprep.subr.mxu0 0.0
    %218 = vmatpush1.msra.mxu0 0.0
    %219 = vmatprep.subr.mxu0 0.0
    %220 = vmatpush1.msra.mxu0 0.0
    %221 = vmatprep.subr.mxu0 0.0
    %222 = vmatpush1.msra.mxu0 0.0
    %223 = vmatprep.subr.mxu0 0.0
    %224 = vmatpush1.msra.mxu0 0.0
    %225 = vmatprep.subr.mxu0 0.0
    %226 = vmatpush1.msra.mxu0 %v119
    %227 = vmatprep.subr.mxu0 0.0
    %228 = vmatpush1.msra.mxu0 %v118
    %229 = vmatprep.subr.mxu0 0.0
    %230 = vmatpush1.msra.mxu0 %v117
    %231 = vmatprep.subr.mxu0 0.0
    %232 = vmatpush1.msra.mxu0 %v116
    %233 = vmatprep.subr.mxu0 0.0
    %234 = vmatpush2.msra.mxu0 0.0
    %235 = vmatprep.subr.mxu0 0.0
    %236 = vmatpush2.msra.mxu0 0.0
    %237 = vmatprep.subr.mxu0 0.0
    %238 = vmatpush2.msra.mxu0 0.0
    %239 = vmatprep.subr.mxu0 0.0
    %240 = vmatpush2.msra.mxu0 0.0
    %241 = vmatprep.subr.mxu0 0.0
    %242 = vmatpush2.msra.mxu0 0.0
    %243 = vmatprep.subr.mxu0 0.0
    %244 = vmatpush2.msra.mxu0 0.0
    %245 = vmatprep.subr.mxu0 0.0
    %246 = vmatpush2.msra.mxu0 0.0
    %247 = vmatprep.subr.mxu0 0.0
    %248 = vmatpush2.msra.mxu0 0.0
    %249 = vmatprep.subr.mxu0 0.0
    %250 = vmatpush2.msra.mxu0 0.0
    %251 = vmatprep.subr.mxu0 0.0
    %252 = vmatpush2.msra.mxu0 0.0
    %253 = vmatprep.subr.mxu0 0.0
    %254 = vmatpush2.msra.mxu0 0.0
    %255 = vmatprep.subr.mxu0 0.0
    %256 = vmatpush2.msra.mxu0 0.0
    %257 = vmatprep.subr.mxu0 0.0
    %258 = vmatpush2.msra.mxu0 0.0
    %259 = vmatprep.subr.mxu0 0.0
    %260 = vmatpush2.msra.mxu0 0.0
    %261 = vmatprep.subr.mxu0 0.0
    %262 = vmatpush2.msra.mxu0 0.0
    %263 = vmatprep.subr.mxu0 0.0
    %264 = vmatpush2.msra.mxu0 0.0
    %265 = vmatprep.mubr.f32.mxu0 0.0
    %266 = vmatmul.mubr.f32.gmra.mxu0 %v129
    %v267 = vpop.f32.mrf.mxu0
    %v268 = vadd.f32 0.0, %v267
    %v269 = vpop.f32.mrf.mxu0
    %270 = vdwg.mxu0
    %v271 = vld [vmem:[#allocation2] sm:$0x3]
    %v272 = vadd.f32 %v271, %v198
    %v273 = vxor.u32 %v272, 2147483648
    %v274 = vmul.f32 %v273, 1.442695
    %v275 = vpow.pop %v274
    %v276 = vadd.f32 %v275, 1.0
    %v277 = vrcp.pop %v276
    %v278 = vmul.f32 1.0, %v277
    %v279 = vld [vmem:[#allocation5] sm:$0x3]
    %v280 = vadd.f32 %v279, %v268
    %v281 = vxor.u32 %v280, 2147483648
    %v282 = vmul.f32 %v281, 1.442695
    %v283 = vpow.pop %v282
    %v284 = vadd.f32 %v283, 1.0
    %v285 = vrcp.pop %v284
    %v286 = vmul.f32 1.0, %v285
    %v287 = vld [vmem:[#allocation7] sm:$0x3]
    %v289 = vlaneseq
    %v290 = vshrl.u32 %v289, 7
    %v291 = vsub.s32 0, %v290
    %v292 = vrot.slane %v124, %v291
    %294 = vmatprep.subr.mxu0 0.0
    %295 = vmatpush1.msra.mxu0 0.0
    %296 = vmatprep.subr.mxu0 0.0
    %297 = vmatpush1.msra.mxu0 0.0
    %298 = vmatprep.subr.mxu0 0.0
    %299 = vmatpush1.msra.mxu0 0.0
    %300 = vmatprep.subr.mxu0 0.0
    %301 = vmatpush1.msra.mxu0 0.0
    %302 = vmatprep.subr.mxu0 0.0
    %303 = vmatpush1.msra.mxu0 0.0
    %304 = vmatprep.subr.mxu0 0.0
    %305 = vmatpush1.msra.mxu0 0.0
    %306 = vmatprep.subr.mxu0 0.0
    %307 = vmatpush1.msra.mxu0 0.0
    %308 = vmatprep.subr.mxu0 0.0
    %309 = vmatpush1.msra.mxu0 0.0
    %310 = vmatprep.subr.mxu0 0.0
    %311 = vmatpush1.msra.mxu0 0.0
    %312 = vmatprep.subr.mxu0 0.0
    %313 = vmatpush1.msra.mxu0 0.0
    %314 = vmatprep.subr.mxu0 0.0
    %315 = vmatpush1.msra.mxu0 0.0
    %316 = vmatprep.subr.mxu0 0.0
    %317 = vmatpush1.msra.mxu0 0.0
    %318 = vmatprep.subr.mxu0 0.0
    %319 = vmatpush1.msra.mxu0 %v123
    %320 = vmatprep.subr.mxu0 0.0
    %321 = vmatpush1.msra.mxu0 %v122
    %322 = vmatprep.subr.mxu0 0.0
    %323 = vmatpush1.msra.mxu0 %v121
    %324 = vmatprep.subr.mxu0 0.0
    %325 = vmatpush1.msra.mxu0 %v120
    %326 = vmatprep.subr.mxu0 0.0
    %327 = vmatpush2.msra.mxu0 0.0
    %328 = vmatprep.subr.mxu0 0.0
    %329 = vmatpush2.msra.mxu0 0.0
    %330 = vmatprep.subr.mxu0 0.0
    %331 = vmatpush2.msra.mxu0 0.0
    %332 = vmatprep.subr.mxu0 0.0
    %333 = vmatpush2.msra.mxu0 0.0
    %334 = vmatprep.subr.mxu0 0.0
    %335 = vmatpush2.msra.mxu0 0.0
    %336 = vmatprep.subr.mxu0 0.0
    %337 = vmatpush2.msra.mxu0 0.0
    %338 = vmatprep.subr.mxu0 0.0
    %339 = vmatpush2.msra.mxu0 0.0
    %340 = vmatprep.subr.mxu0 0.0
    %341 = vmatpush2.msra.mxu0 0.0
    %342 = vmatprep.subr.mxu0 0.0
    %343 = vmatpush2.msra.mxu0 0.0
    %344 = vmatprep.subr.mxu0 0.0
    %345 = vmatpush2.msra.mxu0 0.0
    %346 = vmatprep.subr.mxu0 0.0
    %347 = vmatpush2.msra.mxu0 0.0
    %348 = vmatprep.subr.mxu0 0.0
    %349 = vmatpush2.msra.mxu0 0.0
    %350 = vmatprep.subr.mxu0 0.0
    %351 = vmatpush2.msra.mxu0 0.0
    %352 = vmatprep.subr.mxu0 0.0
    %353 = vmatpush2.msra.mxu0 0.0
    %354 = vmatprep.subr.mxu0 0.0
    %355 = vmatpush2.msra.mxu0 0.0
    %356 = vmatprep.subr.mxu0 0.0
    %357 = vmatpush2.msra.mxu0 0.0
    %358 = vmatprep.mubr.f32.mxu0 0.0
    %359 = vmatmul.mubr.f32.gmra.mxu0 %v129
    %v360 = vpop.f32.mrf.mxu0
    %v361 = vadd.f32 %v292, %v360
    %v362 = vpop.f32.mrf.mxu0
    %363 = vdwg.mxu0
    %v364 = vmul.f32 %v278, %v361
    %v365 = vadd.f32 %v287, %v364
    %v366 = vtanh.pop %v365
    %v367 = vsub.f32 0.0, %v366
    %v368 = vmul.f32 %v286, %v367
    %v369 = vadd.f32 %v366, %v368
    %vm370 = vcmp.eq.s32.totalorder %v126, 0
    %v371 = vsel %vm370, 1, 0
    %372 = vset.pattern.permute.xlu0 0
    %373 = vperm.xlu0 %372, %v371
    %v374 = vpop.permute.xlu0 %373
    %vm375 = vcmp.eq.s32.totalorder %v374, 1
    %v376 = vsel %vm375, %v369, 0.0
    %v378 = vsel %vm127, %v369, 0
    %380 = vmatprep.subr.mxu0 0.0
    %381 = vmatpush1.msra.mxu0 0.0
    %382 = vmatprep.subr.mxu0 0.0
    %383 = vmatpush1.msra.mxu0 0.0
    %384 = vmatprep.subr.mxu0 0.0
    %385 = vmatpush1.msra.mxu0 0.0
    %386 = vmatprep.subr.mxu0 0.0
    %387 = vmatpush1.msra.mxu0 0.0
    %388 = vmatprep.subr.mxu0 0.0
    %389 = vmatpush1.msra.mxu0 0.0
    %390 = vmatprep.subr.mxu0 0.0
    %391 = vmatpush1.msra.mxu0 0.0
    %392 = vmatprep.subr.mxu0 0.0
    %393 = vmatpush1.msra.mxu0 0.0
    %394 = vmatprep.subr.mxu0 0.0
    %395 = vmatpush1.msra.mxu0 0.0
    %396 = vmatprep.subr.mxu0 0.0
    %397 = vmatpush1.msra.mxu0 0.0
    %398 = vmatprep.subr.mxu0 0.0
    %399 = vmatpush1.msra.mxu0 0.0
    %400 = vmatprep.subr.mxu0 0.0
    %401 = vmatpush1.msra.mxu0 0.0
    %402 = vmatprep.subr.mxu0 0.0
    %403 = vmatpush1.msra.mxu0 0.0
    %404 = vmatprep.subr.mxu0 0.0
    %405 = vmatpush1.msra.mxu0 %v115
    %406 = vmatprep.subr.mxu0 0.0
    %407 = vmatpush1.msra.mxu0 %v114
    %408 = vmatprep.subr.mxu0 0.0
    %409 = vmatpush1.msra.mxu0 %v113
    %410 = vmatprep.subr.mxu0 0.0
    %411 = vmatpush1.msra.mxu0 %v112
    %412 = vmatprep.subr.mxu0 0.0
    %413 = vmatpush2.msra.mxu0 0.0
    %414 = vmatprep.subr.mxu0 0.0
    %415 = vmatpush2.msra.mxu0 0.0
    %416 = vmatprep.subr.mxu0 0.0
    %417 = vmatpush2.msra.mxu0 0.0
    %418 = vmatprep.subr.mxu0 0.0
    %419 = vmatpush2.msra.mxu0 0.0
    %420 = vmatprep.subr.mxu0 0.0
    %421 = vmatpush2.msra.mxu0 0.0
    %422 = vmatprep.subr.mxu0 0.0
    %423 = vmatpush2.msra.mxu0 0.0
    %424 = vmatprep.subr.mxu0 0.0
    %425 = vmatpush2.msra.mxu0 0.0
    %426 = vmatprep.subr.mxu0 0.0
    %427 = vmatpush2.msra.mxu0 0.0
    %428 = vmatprep.subr.mxu0 0.0
    %429 = vmatpush2.msra.mxu0 0.0
    %430 = vmatprep.subr.mxu0 0.0
    %431 = vmatpush2.msra.mxu0 0.0
    %432 = vmatprep.subr.mxu0 0.0
    %433 = vmatpush2.msra.mxu0 0.0
    %434 = vmatprep.subr.mxu0 0.0
    %435 = vmatpush2.msra.mxu0 0.0
    %436 = vmatprep.subr.mxu0 0.0
    %437 = vmatpush2.msra.mxu0 0.0
    %438 = vmatprep.subr.mxu0 0.0
    %439 = vmatpush2.msra.mxu0 0.0
    %440 = vmatprep.subr.mxu0 0.0
    %441 = vmatpush2.msra.mxu0 0.0
    %442 = vmatprep.subr.mxu0 0.0
    %443 = vmatpush2.msra.mxu0 0.0
    %444 = vmatprep.mubr.f32.mxu0 0.0
    %445 = vmatmul.mubr.f32.gmra.mxu0 %v378
    %v446 = vpop.f32.mrf.mxu0
    %v447 = vadd.f32 0.0, %v446
    %v448 = vpop.f32.mrf.mxu0
    %449 = vdwg.mxu0
    %450 = vmatprep.subr.mxu0 0.0
    %451 = vmatpush1.msra.mxu0 0.0
    %452 = vmatprep.subr.mxu0 0.0
    %453 = vmatpush1.msra.mxu0 0.0
    %454 = vmatprep.subr.mxu0 0.0
    %455 = vmatpush1.msra.mxu0 0.0
    %456 = vmatprep.subr.mxu0 0.0
    %457 = vmatpush1.msra.mxu0 0.0
    %458 = vmatprep.subr.mxu0 0.0
    %459 = vmatpush1.msra.mxu0 0.0
    %460 = vmatprep.subr.mxu0 0.0
    %461 = vmatpush1.msra.mxu0 0.0
    %462 = vmatprep.subr.mxu0 0.0
    %463 = vmatpush1.msra.mxu0 0.0
    %464 = vmatprep.subr.mxu0 0.0
    %465 = vmatpush1.msra.mxu0 0.0
    %466 = vmatprep.subr.mxu0 0.0
    %467 = vmatpush1.msra.mxu0 0.0
    %468 = vmatprep.subr.mxu0 0.0
    %469 = vmatpush1.msra.mxu0 0.0
    %470 = vmatprep.subr.mxu0 0.0
    %471 = vmatpush1.msra.mxu0 0.0
    %472 = vmatprep.subr.mxu0 0.0
    %473 = vmatpush1.msra.mxu0 0.0
    %474 = vmatprep.subr.mxu0 0.0
    %475 = vmatpush1.msra.mxu0 %v119
    %476 = vmatprep.subr.mxu0 0.0
    %477 = vmatpush1.msra.mxu0 %v118
    %478 = vmatprep.subr.mxu0 0.0
    %479 = vmatpush1.msra.mxu0 %v117
    %480 = vmatprep.subr.mxu0 0.0
    %481 = vmatpush1.msra.mxu0 %v116
    %482 = vmatprep.subr.mxu0 0.0
    %483 = vmatpush2.msra.mxu0 0.0
    %484 = vmatprep.subr.mxu0 0.0
    %485 = vmatpush2.msra.mxu0 0.0
    %486 = vmatprep.subr.mxu0 0.0
    %487 = vmatpush2.msra.mxu0 0.0
    %488 = vmatprep.subr.mxu0 0.0
    %489 = vmatpush2.msra.mxu0 0.0
    %490 = vmatprep.subr.mxu0 0.0
    %491 = vmatpush2.msra.mxu0 0.0
    %492 = vmatprep.subr.mxu0 0.0
    %493 = vmatpush2.msra.mxu0 0.0
    %494 = vmatprep.subr.mxu0 0.0
    %495 = vmatpush2.msra.mxu0 0.0
    %496 = vmatprep.subr.mxu0 0.0
    %497 = vmatpush2.msra.mxu0 0.0
    %498 = vmatprep.subr.mxu0 0.0
    %499 = vmatpush2.msra.mxu0 0.0
    %500 = vmatprep.subr.mxu0 0.0
    %501 = vmatpush2.msra.mxu0 0.0
    %502 = vmatprep.subr.mxu0 0.0
    %503 = vmatpush2.msra.mxu0 0.0
    %504 = vmatprep.subr.mxu0 0.0
    %505 = vmatpush2.msra.mxu0 0.0
    %506 = vmatprep.subr.mxu0 0.0
    %507 = vmatpush2.msra.mxu0 0.0
    %508 = vmatprep.subr.mxu0 0.0
    %509 = vmatpush2.msra.mxu0 0.0
    %510 = vmatprep.subr.mxu0 0.0
    %511 = vmatpush2.msra.mxu0 0.0
    %512 = vmatprep.subr.mxu0 0.0
    %513 = vmatpush2.msra.mxu0 0.0
    %514 = vmatprep.mubr.f32.mxu0 0.0
    %515 = vmatmul.mubr.f32.gmra.mxu0 %v378
    %v516 = vpop.f32.mrf.mxu0
    %v517 = vadd.f32 0.0, %v516
    %v518 = vpop.f32.mrf.mxu0
    %519 = vdwg.mxu0
    %s520 = scalar_lea.vmem [#allocation2], 2
    %v521 = vld [vmem:[%s520] sm:$0x3]
    %v522 = vadd.f32 %v521, %v447
    %v523 = vxor.u32 %v522, 2147483648
    %v524 = vmul.f32 %v523, 1.442695
    %v525 = vpow.pop %v524
    %v526 = vadd.f32 %v525, 1.0
    %v527 = vrcp.pop %v526
    %v528 = vmul.f32 1.0, %v527
    %s529 = scalar_lea.vmem [#allocation5], 2
    %v530 = vld [vmem:[%s529] sm:$0x3]
    %v531 = vadd.f32 %v530, %v517
    %v532 = vxor.u32 %v531, 2147483648
    %v533 = vmul.f32 %v532, 1.442695
    %v534 = vpow.pop %v533
    %v535 = vadd.f32 %v534, 1.0
    %v536 = vrcp.pop %v535
    %v537 = vmul.f32 1.0, %v536
    %s538 = scalar_lea.vmem [#allocation7], 2
    %v539 = vld [vmem:[%s538] sm:$0x3]
    %540 = vmatprep.subr.mxu0 0.0
    %541 = vmatpush1.msra.mxu0 0.0
    %542 = vmatprep.subr.mxu0 0.0
    %543 = vmatpush1.msra.mxu0 0.0
    %544 = vmatprep.subr.mxu0 0.0
    %545 = vmatpush1.msra.mxu0 0.0
    %546 = vmatprep.subr.mxu0 0.0
    %547 = vmatpush1.msra.mxu0 0.0
    %548 = vmatprep.subr.mxu0 0.0
    %549 = vmatpush1.msra.mxu0 0.0
    %550 = vmatprep.subr.mxu0 0.0
    %551 = vmatpush1.msra.mxu0 0.0
    %552 = vmatprep.subr.mxu0 0.0
    %553 = vmatpush1.msra.mxu0 0.0
    %554 = vmatprep.subr.mxu0 0.0
    %555 = vmatpush1.msra.mxu0 0.0
    %556 = vmatprep.subr.mxu0 0.0
    %557 = vmatpush1.msra.mxu0 0.0
    %558 = vmatprep.subr.mxu0 0.0
    %559 = vmatpush1.msra.mxu0 0.0
    %560 = vmatprep.subr.mxu0 0.0
    %561 = vmatpush1.msra.mxu0 0.0
    %562 = vmatprep.subr.mxu0 0.0
    %563 = vmatpush1.msra.mxu0 0.0
    %564 = vmatprep.subr.mxu0 0.0
    %565 = vmatpush1.msra.mxu0 %v123
    %566 = vmatprep.subr.mxu0 0.0
    %567 = vmatpush1.msra.mxu0 %v122
    %568 = vmatprep.subr.mxu0 0.0
    %569 = vmatpush1.msra.mxu0 %v121
    %570 = vmatprep.subr.mxu0 0.0
    %571 = vmatpush1.msra.mxu0 %v120
    %572 = vmatprep.subr.mxu0 0.0
    %573 = vmatpush2.msra.mxu0 0.0
    %574 = vmatprep.subr.mxu0 0.0
    %575 = vmatpush2.msra.mxu0 0.0
    %576 = vmatprep.subr.mxu0 0.0
    %577 = vmatpush2.msra.mxu0 0.0
    %578 = vmatprep.subr.mxu0 0.0
    %579 = vmatpush2.msra.mxu0 0.0
    %580 = vmatprep.subr.mxu0 0.0
    %581 = vmatpush2.msra.mxu0 0.0
    %582 = vmatprep.subr.mxu0 0.0
    %583 = vmatpush2.msra.mxu0 0.0
    %584 = vmatprep.subr.mxu0 0.0
    %585 = vmatpush2.msra.mxu0 0.0
    %586 = vmatprep.subr.mxu0 0.0
    %587 = vmatpush2.msra.mxu0 0.0
    %588 = vmatprep.subr.mxu0 0.0
    %589 = vmatpush2.msra.mxu0 0.0
    %590 = vmatprep.subr.mxu0 0.0
    %591 = vmatpush2.msra.mxu0 0.0
    %592 = vmatprep.subr.mxu0 0.0
    %593 = vmatpush2.msra.mxu0 0.0
    %594 = vmatprep.subr.mxu0 0.0
    %595 = vmatpush2.msra.mxu0 0.0
    %596 = vmatprep.subr.mxu0 0.0
    %597 = vmatpush2.msra.mxu0 0.0
    %598 = vmatprep.subr.mxu0 0.0
    %599 = vmatpush2.msra.mxu0 0.0
    %600 = vmatprep.subr.mxu0 0.0
    %601 = vmatpush2.msra.mxu0 0.0
    %602 = vmatprep.subr.mxu0 0.0
    %603 = vmatpush2.msra.mxu0 0.0
    %604 = vmatprep.mubr.f32.mxu0 0.0
    %605 = vmatmul.mubr.f32.gmra.mxu0 %v378
    %v606 = vpop.f32.mrf.mxu0
    %v607 = vadd.f32 %v292, %v606
    %v608 = vpop.f32.mrf.mxu0
    %609 = vdwg.mxu0
    %v610 = vmul.f32 %v528, %v607
    %v611 = vadd.f32 %v539, %v610
    %v612 = vtanh.pop %v611
    %v613 = vsub.f32 %v369, %v612
    %v614 = vmul.f32 %v537, %v613
    %v615 = vadd.f32 %v612, %v614
    %vm616 = vcmp.eq.s32.totalorder %v126, 1
    %v617 = vsel %vm616, 1, 0
    %618 = vset.pattern.permute.xlu0 0
    %619 = vperm.xlu0 %618, %v617
    %v620 = vpop.permute.xlu0 %619
    %vm621 = vcmp.eq.s32.totalorder %v620, 1
    %v622 = vsel %vm621, %v615, %v376
    %v624 = vsel %vm127, %v615, 0
    %626 = vmatprep.subr.mxu0 0.0
    %627 = vmatpush1.msra.mxu0 0.0
    %628 = vmatprep.subr.mxu0 0.0
    %629 = vmatpush1.msra.mxu0 0.0
    %630 = vmatprep.subr.mxu0 0.0
    %631 = vmatpush1.msra.mxu0 0.0
    %632 = vmatprep.subr.mxu0 0.0
    %633 = vmatpush1.msra.mxu0 0.0
    %634 = vmatprep.subr.mxu0 0.0
    %635 = vmatpush1.msra.mxu0 0.0
    %636 = vmatprep.subr.mxu0 0.0
    %637 = vmatpush1.msra.mxu0 0.0
    %638 = vmatprep.subr.mxu0 0.0
    %639 = vmatpush1.msra.mxu0 0.0
    %640 = vmatprep.subr.mxu0 0.0
    %641 = vmatpush1.msra.mxu0 0.0
    %642 = vmatprep.subr.mxu0 0.0
    %643 = vmatpush1.msra.mxu0 0.0
    %644 = vmatprep.subr.mxu0 0.0
    %645 = vmatpush1.msra.mxu0 0.0
    %646 = vmatprep.subr.mxu0 0.0
    %647 = vmatpush1.msra.mxu0 0.0
    %648 = vmatprep.subr.mxu0 0.0
    %649 = vmatpush1.msra.mxu0 0.0
    %650 = vmatprep.subr.mxu0 0.0
    %651 = vmatpush1.msra.mxu0 %v115
    %652 = vmatprep.subr.mxu0 0.0
    %653 = vmatpush1.msra.mxu0 %v114
    %654 = vmatprep.subr.mxu0 0.0
    %655 = vmatpush1.msra.mxu0 %v113
    %656 = vmatprep.subr.mxu0 0.0
    %657 = vmatpush1.msra.mxu0 %v112
    %658 = vmatprep.subr.mxu0 0.0
    %659 = vmatpush2.msra.mxu0 0.0
    %660 = vmatprep.subr.mxu0 0.0
    %661 = vmatpush2.msra.mxu0 0.0
    %662 = vmatprep.subr.mxu0 0.0
    %663 = vmatpush2.msra.mxu0 0.0
    %664 = vmatprep.subr.mxu0 0.0
    %665 = vmatpush2.msra.mxu0 0.0
    %666 = vmatprep.subr.mxu0 0.0
    %667 = vmatpush2.msra.mxu0 0.0
    %668 = vmatprep.subr.mxu0 0.0
    %669 = vmatpush2.msra.mxu0 0.0
    %670 = vmatprep.subr.mxu0 0.0
    %671 = vmatpush2.msra.mxu0 0.0
    %672 = vmatprep.subr.mxu0 0.0
    %673 = vmatpush2.msra.mxu0 0.0
    %674 = vmatprep.subr.mxu0 0.0
    %675 = vmatpush2.msra.mxu0 0.0
    %676 = vmatprep.subr.mxu0 0.0
    %677 = vmatpush2.msra.mxu0 0.0
    %678 = vmatprep.subr.mxu0 0.0
    %679 = vmatpush2.msra.mxu0 0.0
    %680 = vmatprep.subr.mxu0 0.0
    %681 = vmatpush2.msra.mxu0 0.0
    %682 = vmatprep.subr.mxu0 0.0
    %683 = vmatpush2.msra.mxu0 0.0
    %684 = vmatprep.subr.mxu0 0.0
    %685 = vmatpush2.msra.mxu0 0.0
    %686 = vmatprep.subr.mxu0 0.0
    %687 = vmatpush2.msra.mxu0 0.0
    %688 = vmatprep.subr.mxu0 0.0
    %689 = vmatpush2.msra.mxu0 0.0
    %690 = vmatprep.mubr.f32.mxu0 0.0
    %691 = vmatmul.mubr.f32.gmra.mxu0 %v624
    %v692 = vpop.f32.mrf.mxu0
    %v693 = vadd.f32 0.0, %v692
    %v694 = vpop.f32.mrf.mxu0
    %695 = vdwg.mxu0
    %696 = vmatprep.subr.mxu0 0.0
    %697 = vmatpush1.msra.mxu0 0.0
    %698 = vmatprep.subr.mxu0 0.0
    %699 = vmatpush1.msra.mxu0 0.0
    %700 = vmatprep.subr.mxu0 0.0
    %701 = vmatpush1.msra.mxu0 0.0
    %702 = vmatprep.subr.mxu0 0.0
    %703 = vmatpush1.msra.mxu0 0.0
    %704 = vmatprep.subr.mxu0 0.0
    %705 = vmatpush1.msra.mxu0 0.0
    %706 = vmatprep.subr.mxu0 0.0
    %707 = vmatpush1.msra.mxu0 0.0
    %708 = vmatprep.subr.mxu0 0.0
    %709 = vmatpush1.msra.mxu0 0.0
    %710 = vmatprep.subr.mxu0 0.0
    %711 = vmatpush1.msra.mxu0 0.0
    %712 = vmatprep.subr.mxu0 0.0
    %713 = vmatpush1.msra.mxu0 0.0
    %714 = vmatprep.subr.mxu0 0.0
    %715 = vmatpush1.msra.mxu0 0.0
    %716 = vmatprep.subr.mxu0 0.0
    %717 = vmatpush1.msra.mxu0 0.0
    %718 = vmatprep.subr.mxu0 0.0
    %719 = vmatpush1.msra.mxu0 0.0
    %720 = vmatprep.subr.mxu0 0.0
    %721 = vmatpush1.msra.mxu0 %v119
    %722 = vmatprep.subr.mxu0 0.0
    %723 = vmatpush1.msra.mxu0 %v118
    %724 = vmatprep.subr.mxu0 0.0
    %725 = vmatpush1.msra.mxu0 %v117
    %726 = vmatprep.subr.mxu0 0.0
    %727 = vmatpush1.msra.mxu0 %v116
    %728 = vmatprep.subr.mxu0 0.0
    %729 = vmatpush2.msra.mxu0 0.0
    %730 = vmatprep.subr.mxu0 0.0
    %731 = vmatpush2.msra.mxu0 0.0
    %732 = vmatprep.subr.mxu0 0.0
    %733 = vmatpush2.msra.mxu0 0.0
    %734 = vmatprep.subr.mxu0 0.0
    %735 = vmatpush2.msra.mxu0 0.0
    %736 = vmatprep.subr.mxu0 0.0
    %737 = vmatpush2.msra.mxu0 0.0
    %738 = vmatprep.subr.mxu0 0.0
    %739 = vmatpush2.msra.mxu0 0.0
    %740 = vmatprep.subr.mxu0 0.0
    %741 = vmatpush2.msra.mxu0 0.0
    %742 = vmatprep.subr.mxu0 0.0
    %743 = vmatpush2.msra.mxu0 0.0
    %744 = vmatprep.subr.mxu0 0.0
    %745 = vmatpush2.msra.mxu0 0.0
    %746 = vmatprep.subr.mxu0 0.0
    %747 = vmatpush2.msra.mxu0 0.0
    %748 = vmatprep.subr.mxu0 0.0
    %749 = vmatpush2.msra.mxu0 0.0
    %750 = vmatprep.subr.mxu0 0.0
    %751 = vmatpush2.msra.mxu0 0.0
    %752 = vmatprep.subr.mxu0 0.0
    %753 = vmatpush2.msra.mxu0 0.0
    %754 = vmatprep.subr.mxu0 0.0
    %755 = vmatpush2.msra.mxu0 0.0
    %756 = vmatprep.subr.mxu0 0.0
    %757 = vmatpush2.msra.mxu0 0.0
    %758 = vmatprep.subr.mxu0 0.0
    %759 = vmatpush2.msra.mxu0 0.0
    %760 = vmatprep.mubr.f32.mxu0 0.0
    %761 = vmatmul.mubr.f32.gmra.mxu0 %v624
    %v762 = vpop.f32.mrf.mxu0
    %v763 = vadd.f32 0.0, %v762
    %v764 = vpop.f32.mrf.mxu0
    %765 = vdwg.mxu0
    %s766 = scalar_lea.vmem [#allocation2], 4
    %v767 = vld [vmem:[%s766] sm:$0x3]
    %v768 = vadd.f32 %v767, %v693
    %v769 = vxor.u32 %v768, 2147483648
    %v770 = vmul.f32 %v769, 1.442695
    %v771 = vpow.pop %v770
    %v772 = vadd.f32 %v771, 1.0
    %v773 = vrcp.pop %v772
    %v774 = vmul.f32 1.0, %v773
    %s775 = scalar_lea.vmem [#allocation5], 4
    %v776 = vld [vmem:[%s775] sm:$0x3]
    %v777 = vadd.f32 %v776, %v763
    %v778 = vxor.u32 %v777, 2147483648
    %v779 = vmul.f32 %v778, 1.442695
    %v780 = vpow.pop %v779
    %v781 = vadd.f32 %v780, 1.0
    %v782 = vrcp.pop %v781
    %v783 = vmul.f32 1.0, %v782
    %s784 = scalar_lea.vmem [#allocation7], 4
    %v785 = vld [vmem:[%s784] sm:$0x3]
    %786 = vmatprep.subr.mxu0 0.0
    %787 = vmatpush1.msra.mxu0 0.0
    %788 = vmatprep.subr.mxu0 0.0
    %789 = vmatpush1.msra.mxu0 0.0
    %790 = vmatprep.subr.mxu0 0.0
    %791 = vmatpush1.msra.mxu0 0.0
    %792 = vmatprep.subr.mxu0 0.0
    %793 = vmatpush1.msra.mxu0 0.0
    %794 = vmatprep.subr.mxu0 0.0
    %795 = vmatpush1.msra.mxu0 0.0
    %796 = vmatprep.subr.mxu0 0.0
    %797 = vmatpush1.msra.mxu0 0.0
    %798 = vmatprep.subr.mxu0 0.0
    %799 = vmatpush1.msra.mxu0 0.0
    %800 = vmatprep.subr.mxu0 0.0
    %801 = vmatpush1.msra.mxu0 0.0
    %802 = vmatprep.subr.mxu0 0.0
    %803 = vmatpush1.msra.mxu0 0.0
    %804 = vmatprep.subr.mxu0 0.0
    %805 = vmatpush1.msra.mxu0 0.0
    %806 = vmatprep.subr.mxu0 0.0
    %807 = vmatpush1.msra.mxu0 0.0
    %808 = vmatprep.subr.mxu0 0.0
    %809 = vmatpush1.msra.mxu0 0.0
    %810 = vmatprep.subr.mxu0 0.0
    %811 = vmatpush1.msra.mxu0 %v123
    %812 = vmatprep.subr.mxu0 0.0
    %813 = vmatpush1.msra.mxu0 %v122
    %814 = vmatprep.subr.mxu0 0.0
    %815 = vmatpush1.msra.mxu0 %v121
    %816 = vmatprep.subr.mxu0 0.0
    %817 = vmatpush1.msra.mxu0 %v120
    %818 = vmatprep.subr.mxu0 0.0
    %819 = vmatpush2.msra.mxu0 0.0
    %820 = vmatprep.subr.mxu0 0.0
    %821 = vmatpush2.msra.mxu0 0.0
    %822 = vmatprep.subr.mxu0 0.0
    %823 = vmatpush2.msra.mxu0 0.0
    %824 = vmatprep.subr.mxu0 0.0
    %825 = vmatpush2.msra.mxu0 0.0
    %826 = vmatprep.subr.mxu0 0.0
    %827 = vmatpush2.msra.mxu0 0.0
    %828 = vmatprep.subr.mxu0 0.0
    %829 = vmatpush2.msra.mxu0 0.0
    %830 = vmatprep.subr.mxu0 0.0
    %831 = vmatpush2.msra.mxu0 0.0
    %832 = vmatprep.subr.mxu0 0.0
    %833 = vmatpush2.msra.mxu0 0.0
    %834 = vmatprep.subr.mxu0 0.0
    %835 = vmatpush2.msra.mxu0 0.0
    %836 = vmatprep.subr.mxu0 0.0
    %837 = vmatpush2.msra.mxu0 0.0
    %838 = vmatprep.subr.mxu0 0.0
    %839 = vmatpush2.msra.mxu0 0.0
    %840 = vmatprep.subr.mxu0 0.0
    %841 = vmatpush2.msra.mxu0 0.0
    %842 = vmatprep.subr.mxu0 0.0
    %843 = vmatpush2.msra.mxu0 0.0
    %844 = vmatprep.subr.mxu0 0.0
    %845 = vmatpush2.msra.mxu0 0.0
    %846 = vmatprep.subr.mxu0 0.0
    %847 = vmatpush2.msra.mxu0 0.0
    %848 = vmatprep.subr.mxu0 0.0
    %849 = vmatpush2.msra.mxu0 0.0
    %850 = vmatprep.mubr.f32.mxu0 0.0
    %851 = vmatmul.mubr.f32.gmra.mxu0 %v624
    %v852 = vpop.f32.mrf.mxu0
    %v853 = vadd.f32 %v292, %v852
    %v854 = vpop.f32.mrf.mxu0
    %855 = vdwg.mxu0
    %v856 = vmul.f32 %v774, %v853
    %v857 = vadd.f32 %v785, %v856
    %v858 = vtanh.pop %v857
    %v859 = vsub.f32 %v615, %v858
    %v860 = vmul.f32 %v783, %v859
    %v861 = vadd.f32 %v858, %v860
    %vm862 = vcmp.eq.s32.totalorder %v126, 2
    %v863 = vsel %vm862, 1, 0
    %864 = vset.pattern.permute.xlu0 0
    %865 = vperm.xlu0 %864, %v863
    %v866 = vpop.permute.xlu0 %865
    %vm867 = vcmp.eq.s32.totalorder %v866, 1
    %v868 = vsel %vm867, %v861, %v622
    %v870 = vsel %vm127, %v861, 0
    %872 = vmatprep.subr.mxu0 0.0
    %873 = vmatpush1.msra.mxu0 0.0
    %874 = vmatprep.subr.mxu0 0.0
    %875 = vmatpush1.msra.mxu0 0.0
    %876 = vmatprep.subr.mxu0 0.0
    %877 = vmatpush1.msra.mxu0 0.0
    %878 = vmatprep.subr.mxu0 0.0
    %879 = vmatpush1.msra.mxu0 0.0
    %880 = vmatprep.subr.mxu0 0.0
    %881 = vmatpush1.msra.mxu0 0.0
    %882 = vmatprep.subr.mxu0 0.0
    %883 = vmatpush1.msra.mxu0 0.0
    %884 = vmatprep.subr.mxu0 0.0
    %885 = vmatpush1.msra.mxu0 0.0
    %886 = vmatprep.subr.mxu0 0.0
    %887 = vmatpush1.msra.mxu0 0.0
    %888 = vmatprep.subr.mxu0 0.0
    %889 = vmatpush1.msra.mxu0 0.0
    %890 = vmatprep.subr.mxu0 0.0
    %891 = vmatpush1.msra.mxu0 0.0
    %892 = vmatprep.subr.mxu0 0.0
    %893 = vmatpush1.msra.mxu0 0.0
    %894 = vmatprep.subr.mxu0 0.0
    %895 = vmatpush1.msra.mxu0 0.0
    %896 = vmatprep.subr.mxu0 0.0
    %897 = vmatpush1.msra.mxu0 %v115
    %898 = vmatprep.subr.mxu0 0.0
    %899 = vmatpush1.msra.mxu0 %v114
    %900 = vmatprep.subr.mxu0 0.0
    %901 = vmatpush1.msra.mxu0 %v113
    %902 = vmatprep.subr.mxu0 0.0
    %903 = vmatpush1.msra.mxu0 %v112
    %904 = vmatprep.subr.mxu0 0.0
    %905 = vmatpush2.msra.mxu0 0.0
    %906 = vmatprep.subr.mxu0 0.0
    %907 = vmatpush2.msra.mxu0 0.0
    %908 = vmatprep.subr.mxu0 0.0
    %909 = vmatpush2.msra.mxu0 0.0
    %910 = vmatprep.subr.mxu0 0.0
    %911 = vmatpush2.msra.mxu0 0.0
    %912 = vmatprep.subr.mxu0 0.0
    %913 = vmatpush2.msra.mxu0 0.0
    %914 = vmatprep.subr.mxu0 0.0
    %915 = vmatpush2.msra.mxu0 0.0
    %916 = vmatprep.subr.mxu0 0.0
    %917 = vmatpush2.msra.mxu0 0.0
    %918 = vmatprep.subr.mxu0 0.0
    %919 = vmatpush2.msra.mxu0 0.0
    %920 = vmatprep.subr.mxu0 0.0
    %921 = vmatpush2.msra.mxu0 0.0
    %922 = vmatprep.subr.mxu0 0.0
    %923 = vmatpush2.msra.mxu0 0.0
    %924 = vmatprep.subr.mxu0 0.0
    %925 = vmatpush2.msra.mxu0 0.0
    %926 = vmatprep.subr.mxu0 0.0
    %927 = vmatpush2.msra.mxu0 0.0
    %928 = vmatprep.subr.mxu0 0.0
    %929 = vmatpush2.msra.mxu0 0.0
    %930 = vmatprep.subr.mxu0 0.0
    %931 = vmatpush2.msra.mxu0 0.0
    %932 = vmatprep.subr.mxu0 0.0
    %933 = vmatpush2.msra.mxu0 0.0
    %934 = vmatprep.subr.mxu0 0.0
    %935 = vmatpush2.msra.mxu0 0.0
    %936 = vmatprep.mubr.f32.mxu0 0.0
    %937 = vmatmul.mubr.f32.gmra.mxu0 %v870
    %v938 = vpop.f32.mrf.mxu0
    %v939 = vadd.f32 0.0, %v938
    %v940 = vpop.f32.mrf.mxu0
    %941 = vdwg.mxu0
    %942 = vmatprep.subr.mxu0 0.0
    %943 = vmatpush1.msra.mxu0 0.0
    %944 = vmatprep.subr.mxu0 0.0
    %945 = vmatpush1.msra.mxu0 0.0
    %946 = vmatprep.subr.mxu0 0.0
    %947 = vmatpush1.msra.mxu0 0.0
    %948 = vmatprep.subr.mxu0 0.0
    %949 = vmatpush1.msra.mxu0 0.0
    %950 = vmatprep.subr.mxu0 0.0
    %951 = vmatpush1.msra.mxu0 0.0
    %952 = vmatprep.subr.mxu0 0.0
    %953 = vmatpush1.msra.mxu0 0.0
    %954 = vmatprep.subr.mxu0 0.0
    %955 = vmatpush1.msra.mxu0 0.0
    %956 = vmatprep.subr.mxu0 0.0
    %957 = vmatpush1.msra.mxu0 0.0
    %958 = vmatprep.subr.mxu0 0.0
    %959 = vmatpush1.msra.mxu0 0.0
    %960 = vmatprep.subr.mxu0 0.0
    %961 = vmatpush1.msra.mxu0 0.0
    %962 = vmatprep.subr.mxu0 0.0
    %963 = vmatpush1.msra.mxu0 0.0
    %964 = vmatprep.subr.mxu0 0.0
    %965 = vmatpush1.msra.mxu0 0.0
    %966 = vmatprep.subr.mxu0 0.0
    %967 = vmatpush1.msra.mxu0 %v119
    %968 = vmatprep.subr.mxu0 0.0
    %969 = vmatpush1.msra.mxu0 %v118
    %970 = vmatprep.subr.mxu0 0.0
    %971 = vmatpush1.msra.mxu0 %v117
    %972 = vmatprep.subr.mxu0 0.0
    %973 = vmatpush1.msra.mxu0 %v116
    %974 = vmatprep.subr.mxu0 0.0
    %975 = vmatpush2.msra.mxu0 0.0
    %976 = vmatprep.subr.mxu0 0.0
    %977 = vmatpush2.msra.mxu0 0.0
    %978 = vmatprep.subr.mxu0 0.0
    %979 = vmatpush2.msra.mxu0 0.0
    %980 = vmatprep.subr.mxu0 0.0
    %981 = vmatpush2.msra.mxu0 0.0
    %982 = vmatprep.subr.mxu0 0.0
    %983 = vmatpush2.msra.mxu0 0.0
    %984 = vmatprep.subr.mxu0 0.0
    %985 = vmatpush2.msra.mxu0 0.0
    %986 = vmatprep.subr.mxu0 0.0
    %987 = vmatpush2.msra.mxu0 0.0
    %988 = vmatprep.subr.mxu0 0.0
    %989 = vmatpush2.msra.mxu0 0.0
    %990 = vmatprep.subr.mxu0 0.0
    %991 = vmatpush2.msra.mxu0 0.0
    %992 = vmatprep.subr.mxu0 0.0
    %993 = vmatpush2.msra.mxu0 0.0
    %994 = vmatprep.subr.mxu0 0.0
    %995 = vmatpush2.msra.mxu0 0.0
    %996 = vmatprep.subr.mxu0 0.0
    %997 = vmatpush2.msra.mxu0 0.0
    %998 = vmatprep.subr.mxu0 0.0
    %999 = vmatpush2.msra.mxu0 0.0
    %1000 = vmatprep.subr.mxu0 0.0
    %1001 = vmatpush2.msra.mxu0 0.0
    %1002 = vmatprep.subr.mxu0 0.0
    %1003 = vmatpush2.msra.mxu0 0.0
    %1004 = vmatprep.subr.mxu0 0.0
    %1005 = vmatpush2.msra.mxu0 0.0
    %1006 = vmatprep.mubr.f32.mxu0 0.0
    %1007 = vmatmul.mubr.f32.gmra.mxu0 %v870
    %v1008 = vpop.f32.mrf.mxu0
    %v1009 = vadd.f32 0.0, %v1008
    %v1010 = vpop.f32.mrf.mxu0
    %1011 = vdwg.mxu0
    %s1012 = scalar_lea.vmem [#allocation2], 6
    %v1013 = vld [vmem:[%s1012] sm:$0x3]
    %v1014 = vadd.f32 %v1013, %v939
    %v1015 = vxor.u32 %v1014, 2147483648
    %v1016 = vmul.f32 %v1015, 1.442695
    %v1017 = vpow.pop %v1016
    %v1018 = vadd.f32 %v1017, 1.0
    %v1019 = vrcp.pop %v1018
    %v1020 = vmul.f32 1.0, %v1019
    %s1021 = scalar_lea.vmem [#allocation5], 6
    %v1022 = vld [vmem:[%s1021] sm:$0x3]
    %v1023 = vadd.f32 %v1022, %v1009
    %v1024 = vxor.u32 %v1023, 2147483648
    %v1025 = vmul.f32 %v1024, 1.442695
    %v1026 = vpow.pop %v1025
    %v1027 = vadd.f32 %v1026, 1.0
    %v1028 = vrcp.pop %v1027
    %v1029 = vmul.f32 1.0, %v1028
    %s1030 = scalar_lea.vmem [#allocation7], 6
    %v1031 = vld [vmem:[%s1030] sm:$0x3]
    %1032 = vmatprep.subr.mxu0 0.0
    %1033 = vmatpush1.msra.mxu0 0.0
    %1034 = vmatprep.subr.mxu0 0.0
    %1035 = vmatpush1.msra.mxu0 0.0
    %1036 = vmatprep.subr.mxu0 0.0
    %1037 = vmatpush1.msra.mxu0 0.0
    %1038 = vmatprep.subr.mxu0 0.0
    %1039 = vmatpush1.msra.mxu0 0.0
    %1040 = vmatprep.subr.mxu0 0.0
    %1041 = vmatpush1.msra.mxu0 0.0
    %1042 = vmatprep.subr.mxu0 0.0
    %1043 = vmatpush1.msra.mxu0 0.0
    %1044 = vmatprep.subr.mxu0 0.0
    %1045 = vmatpush1.msra.mxu0 0.0
    %1046 = vmatprep.subr.mxu0 0.0
    %1047 = vmatpush1.msra.mxu0 0.0
    %1048 = vmatprep.subr.mxu0 0.0
    %1049 = vmatpush1.msra.mxu0 0.0
    %1050 = vmatprep.subr.mxu0 0.0
    %1051 = vmatpush1.msra.mxu0 0.0
    %1052 = vmatprep.subr.mxu0 0.0
    %1053 = vmatpush1.msra.mxu0 0.0
    %1054 = vmatprep.subr.mxu0 0.0
    %1055 = vmatpush1.msra.mxu0 0.0
    %1056 = vmatprep.subr.mxu0 0.0
    %1057 = vmatpush1.msra.mxu0 %v123
    %1058 = vmatprep.subr.mxu0 0.0
    %1059 = vmatpush1.msra.mxu0 %v122
    %1060 = vmatprep.subr.mxu0 0.0
    %1061 = vmatpush1.msra.mxu0 %v121
    %1062 = vmatprep.subr.mxu0 0.0
    %1063 = vmatpush1.msra.mxu0 %v120
    %1064 = vmatprep.subr.mxu0 0.0
    %1065 = vmatpush2.msra.mxu0 0.0
    %1066 = vmatprep.subr.mxu0 0.0
    %1067 = vmatpush2.msra.mxu0 0.0
    %1068 = vmatprep.subr.mxu0 0.0
    %1069 = vmatpush2.msra.mxu0 0.0
    %1070 = vmatprep.subr.mxu0 0.0
    %1071 = vmatpush2.msra.mxu0 0.0
    %1072 = vmatprep.subr.mxu0 0.0
    %1073 = vmatpush2.msra.mxu0 0.0
    %1074 = vmatprep.subr.mxu0 0.0
    %1075 = vmatpush2.msra.mxu0 0.0
    %1076 = vmatprep.subr.mxu0 0.0
    %1077 = vmatpush2.msra.mxu0 0.0
    %1078 = vmatprep.subr.mxu0 0.0
    %1079 = vmatpush2.msra.mxu0 0.0
    %1080 = vmatprep.subr.mxu0 0.0
    %1081 = vmatpush2.msra.mxu0 0.0
    %1082 = vmatprep.subr.mxu0 0.0
    %1083 = vmatpush2.msra.mxu0 0.0
    %1084 = vmatprep.subr.mxu0 0.0
    %1085 = vmatpush2.msra.mxu0 0.0
    %1086 = vmatprep.subr.mxu0 0.0
    %1087 = vmatpush2.msra.mxu0 0.0
    %1088 = vmatprep.subr.mxu0 0.0
    %1089 = vmatpush2.msra.mxu0 0.0
    %1090 = vmatprep.subr.mxu0 0.0
    %1091 = vmatpush2.msra.mxu0 0.0
    %1092 = vmatprep.subr.mxu0 0.0
    %1093 = vmatpush2.msra.mxu0 0.0
    %1094 = vmatprep.subr.mxu0 0.0
    %1095 = vmatpush2.msra.mxu0 0.0
    %1096 = vmatprep.mubr.f32.mxu0 0.0
    %1097 = vmatmul.mubr.f32.gmra.mxu0 %v870
    %v1098 = vpop.f32.mrf.mxu0
    %v1099 = vadd.f32 %v292, %v1098
    %v1100 = vpop.f32.mrf.mxu0
    %1101 = vdwg.mxu0
    %v1102 = vmul.f32 %v1020, %v1099
    %v1103 = vadd.f32 %v1031, %v1102
    %v1104 = vtanh.pop %v1103
    %v1105 = vsub.f32 %v861, %v1104
    %v1106 = vmul.f32 %v1029, %v1105
    %v1107 = vadd.f32 %v1104, %v1106
    %vm1108 = vcmp.eq.s32.totalorder %v126, 3
    %v1109 = vsel %vm1108, 1, 0
    %1110 = vset.pattern.permute.xlu0 0
    %1111 = vperm.xlu0 %1110, %v1109
    %v1112 = vpop.permute.xlu0 %1111
    %vm1113 = vcmp.eq.s32.totalorder %v1112, 1
    %v1114 = vsel %vm1113, %v1107, %v868
    %v1116 = vsel %vm127, %v1107, 0
    %1118 = vmatprep.subr.mxu0 0.0
    %1119 = vmatpush1.msra.mxu0 0.0
    %1120 = vmatprep.subr.mxu0 0.0
    %1121 = vmatpush1.msra.mxu0 0.0
    %1122 = vmatprep.subr.mxu0 0.0
    %1123 = vmatpush1.msra.mxu0 0.0
    %1124 = vmatprep.subr.mxu0 0.0
    %1125 = vmatpush1.msra.mxu0 0.0
    %1126 = vmatprep.subr.mxu0 0.0
    %1127 = vmatpush1.msra.mxu0 0.0
    %1128 = vmatprep.subr.mxu0 0.0
    %1129 = vmatpush1.msra.mxu0 0.0
    %1130 = vmatprep.subr.mxu0 0.0
    %1131 = vmatpush1.msra.mxu0 0.0
    %1132 = vmatprep.subr.mxu0 0.0
    %1133 = vmatpush1.msra.mxu0 0.0
    %1134 = vmatprep.subr.mxu0 0.0
    %1135 = vmatpush1.msra.mxu0 0.0
    %1136 = vmatprep.subr.mxu0 0.0
    %1137 = vmatpush1.msra.mxu0 0.0
    %1138 = vmatprep.subr.mxu0 0.0
    %1139 = vmatpush1.msra.mxu0 0.0
    %1140 = vmatprep.subr.mxu0 0.0
    %1141 = vmatpush1.msra.mxu0 0.0
    %1142 = vmatprep.subr.mxu0 0.0
    %1143 = vmatpush1.msra.mxu0 %v115
    %1144 = vmatprep.subr.mxu0 0.0
    %1145 = vmatpush1.msra.mxu0 %v114
    %1146 = vmatprep.subr.mxu0 0.0
    %1147 = vmatpush1.msra.mxu0 %v113
    %1148 = vmatprep.subr.mxu0 0.0
    %1149 = vmatpush1.msra.mxu0 %v112
    %1150 = vmatprep.subr.mxu0 0.0
    %1151 = vmatpush2.msra.mxu0 0.0
    %1152 = vmatprep.subr.mxu0 0.0
    %1153 = vmatpush2.msra.mxu0 0.0
    %1154 = vmatprep.subr.mxu0 0.0
    %1155 = vmatpush2.msra.mxu0 0.0
    %1156 = vmatprep.subr.mxu0 0.0
    %1157 = vmatpush2.msra.mxu0 0.0
    %1158 = vmatprep.subr.mxu0 0.0
    %1159 = vmatpush2.msra.mxu0 0.0
    %1160 = vmatprep.subr.mxu0 0.0
    %1161 = vmatpush2.msra.mxu0 0.0
    %1162 = vmatprep.subr.mxu0 0.0
    %1163 = vmatpush2.msra.mxu0 0.0
    %1164 = vmatprep.subr.mxu0 0.0
    %1165 = vmatpush2.msra.mxu0 0.0
    %1166 = vmatprep.subr.mxu0 0.0
    %1167 = vmatpush2.msra.mxu0 0.0
    %1168 = vmatprep.subr.mxu0 0.0
    %1169 = vmatpush2.msra.mxu0 0.0
    %1170 = vmatprep.subr.mxu0 0.0
    %1171 = vmatpush2.msra.mxu0 0.0
    %1172 = vmatprep.subr.mxu0 0.0
    %1173 = vmatpush2.msra.mxu0 0.0
    %1174 = vmatprep.subr.mxu0 0.0
    %1175 = vmatpush2.msra.mxu0 0.0
    %1176 = vmatprep.subr.mxu0 0.0
    %1177 = vmatpush2.msra.mxu0 0.0
    %1178 = vmatprep.subr.mxu0 0.0
    %1179 = vmatpush2.msra.mxu0 0.0
    %1180 = vmatprep.subr.mxu0 0.0
    %1181 = vmatpush2.msra.mxu0 0.0
    %1182 = vmatprep.mubr.f32.mxu0 0.0
    %1183 = vmatmul.mubr.f32.gmra.mxu0 %v1116
    %v1184 = vpop.f32.mrf.mxu0
    %v1185 = vadd.f32 0.0, %v1184
    %v1186 = vpop.f32.mrf.mxu0
    %1187 = vdwg.mxu0
    %1188 = vmatprep.subr.mxu0 0.0
    %1189 = vmatpush1.msra.mxu0 0.0
    %1190 = vmatprep.subr.mxu0 0.0
    %1191 = vmatpush1.msra.mxu0 0.0
    %1192 = vmatprep.subr.mxu0 0.0
    %1193 = vmatpush1.msra.mxu0 0.0
    %1194 = vmatprep.subr.mxu0 0.0
    %1195 = vmatpush1.msra.mxu0 0.0
    %1196 = vmatprep.subr.mxu0 0.0
    %1197 = vmatpush1.msra.mxu0 0.0
    %1198 = vmatprep.subr.mxu0 0.0
    %1199 = vmatpush1.msra.mxu0 0.0
    %1200 = vmatprep.subr.mxu0 0.0
    %1201 = vmatpush1.msra.mxu0 0.0
    %1202 = vmatprep.subr.mxu0 0.0
    %1203 = vmatpush1.msra.mxu0 0.0
    %1204 = vmatprep.subr.mxu0 0.0
    %1205 = vmatpush1.msra.mxu0 0.0
    %1206 = vmatprep.subr.mxu0 0.0
    %1207 = vmatpush1.msra.mxu0 0.0
    %1208 = vmatprep.subr.mxu0 0.0
    %1209 = vmatpush1.msra.mxu0 0.0
    %1210 = vmatprep.subr.mxu0 0.0
    %1211 = vmatpush1.msra.mxu0 0.0
    %1212 = vmatprep.subr.mxu0 0.0
    %1213 = vmatpush1.msra.mxu0 %v119
    %1214 = vmatprep.subr.mxu0 0.0
    %1215 = vmatpush1.msra.mxu0 %v118
    %1216 = vmatprep.subr.mxu0 0.0
    %1217 = vmatpush1.msra.mxu0 %v117
    %1218 = vmatprep.subr.mxu0 0.0
    %1219 = vmatpush1.msra.mxu0 %v116
    %1220 = vmatprep.subr.mxu0 0.0
    %1221 = vmatpush2.msra.mxu0 0.0
    %1222 = vmatprep.subr.mxu0 0.0
    %1223 = vmatpush2.msra.mxu0 0.0
    %1224 = vmatprep.subr.mxu0 0.0
    %1225 = vmatpush2.msra.mxu0 0.0
    %1226 = vmatprep.subr.mxu0 0.0
    %1227 = vmatpush2.msra.mxu0 0.0
    %1228 = vmatprep.subr.mxu0 0.0
    %1229 = vmatpush2.msra.mxu0 0.0
    %1230 = vmatprep.subr.mxu0 0.0
    %1231 = vmatpush2.msra.mxu0 0.0
    %1232 = vmatprep.subr.mxu0 0.0
    %1233 = vmatpush2.msra.mxu0 0.0
    %1234 = vmatprep.subr.mxu0 0.0
    %1235 = vmatpush2.msra.mxu0 0.0
    %1236 = vmatprep.subr.mxu0 0.0
    %1237 = vmatpush2.msra.mxu0 0.0
    %1238 = vmatprep.subr.mxu0 0.0
    %1239 = vmatpush2.msra.mxu0 0.0
    %1240 = vmatprep.subr.mxu0 0.0
    %1241 = vmatpush2.msra.mxu0 0.0
    %1242 = vmatprep.subr.mxu0 0.0
    %1243 = vmatpush2.msra.mxu0 0.0
    %1244 = vmatprep.subr.mxu0 0.0
    %1245 = vmatpush2.msra.mxu0 0.0
    %1246 = vmatprep.subr.mxu0 0.0
    %1247 = vmatpush2.msra.mxu0 0.0
    %1248 = vmatprep.subr.mxu0 0.0
    %1249 = vmatpush2.msra.mxu0 0.0
    %1250 = vmatprep.subr.mxu0 0.0
    %1251 = vmatpush2.msra.mxu0 0.0
    %1252 = vmatprep.mubr.f32.mxu0 0.0
    %1253 = vmatmul.mubr.f32.gmra.mxu0 %v1116
    %v1254 = vpop.f32.mrf.mxu0
    %v1255 = vadd.f32 0.0, %v1254
    %v1256 = vpop.f32.mrf.mxu0
    %1257 = vdwg.mxu0
    %s1258 = scalar_lea.vmem [#allocation2], 8
    %v1259 = vld [vmem:[%s1258] sm:$0x3]
    %v1260 = vadd.f32 %v1259, %v1185
    %v1261 = vxor.u32 %v1260, 2147483648
    %v1262 = vmul.f32 %v1261, 1.442695
    %v1263 = vpow.pop %v1262
    %v1264 = vadd.f32 %v1263, 1.0
    %v1265 = vrcp.pop %v1264
    %v1266 = vmul.f32 1.0, %v1265
    %s1267 = scalar_lea.vmem [#allocation5], 8
    %v1268 = vld [vmem:[%s1267] sm:$0x3]
    %v1269 = vadd.f32 %v1268, %v1255
    %v1270 = vxor.u32 %v1269, 2147483648
    %v1271 = vmul.f32 %v1270, 1.442695
    %v1272 = vpow.pop %v1271
    %v1273 = vadd.f32 %v1272, 1.0
    %v1274 = vrcp.pop %v1273
    %v1275 = vmul.f32 1.0, %v1274
    %s1276 = scalar_lea.vmem [#allocation7], 8
    %v1277 = vld [vmem:[%s1276] sm:$0x3]
    %1278 = vmatprep.subr.mxu0 0.0
    %1279 = vmatpush1.msra.mxu0 0.0
    %1280 = vmatprep.subr.mxu0 0.0
    %1281 = vmatpush1.msra.mxu0 0.0
    %1282 = vmatprep.subr.mxu0 0.0
    %1283 = vmatpush1.msra.mxu0 0.0
    %1284 = vmatprep.subr.mxu0 0.0
    %1285 = vmatpush1.msra.mxu0 0.0
    %1286 = vmatprep.subr.mxu0 0.0
    %1287 = vmatpush1.msra.mxu0 0.0
    %1288 = vmatprep.subr.mxu0 0.0
    %1289 = vmatpush1.msra.mxu0 0.0
    %1290 = vmatprep.subr.mxu0 0.0
    %1291 = vmatpush1.msra.mxu0 0.0
    %1292 = vmatprep.subr.mxu0 0.0
    %1293 = vmatpush1.msra.mxu0 0.0
    %1294 = vmatprep.subr.mxu0 0.0
    %1295 = vmatpush1.msra.mxu0 0.0
    %1296 = vmatprep.subr.mxu0 0.0
    %1297 = vmatpush1.msra.mxu0 0.0
    %1298 = vmatprep.subr.mxu0 0.0
    %1299 = vmatpush1.msra.mxu0 0.0
    %1300 = vmatprep.subr.mxu0 0.0
    %1301 = vmatpush1.msra.mxu0 0.0
    %1302 = vmatprep.subr.mxu0 0.0
    %1303 = vmatpush1.msra.mxu0 %v123
    %1304 = vmatprep.subr.mxu0 0.0
    %1305 = vmatpush1.msra.mxu0 %v122
    %1306 = vmatprep.subr.mxu0 0.0
    %1307 = vmatpush1.msra.mxu0 %v121
    %1308 = vmatprep.subr.mxu0 0.0
    %1309 = vmatpush1.msra.mxu0 %v120
    %1310 = vmatprep.subr.mxu0 0.0
    %1311 = vmatpush2.msra.mxu0 0.0
    %1312 = vmatprep.subr.mxu0 0.0
    %1313 = vmatpush2.msra.mxu0 0.0
    %1314 = vmatprep.subr.mxu0 0.0
    %1315 = vmatpush2.msra.mxu0 0.0
    %1316 = vmatprep.subr.mxu0 0.0
    %1317 = vmatpush2.msra.mxu0 0.0
    %1318 = vmatprep.subr.mxu0 0.0
    %1319 = vmatpush2.msra.mxu0 0.0
    %1320 = vmatprep.subr.mxu0 0.0
    %1321 = vmatpush2.msra.mxu0 0.0
    %1322 = vmatprep.subr.mxu0 0.0
    %1323 = vmatpush2.msra.mxu0 0.0
    %1324 = vmatprep.subr.mxu0 0.0
    %1325 = vmatpush2.msra.mxu0 0.0
    %1326 = vmatprep.subr.mxu0 0.0
    %1327 = vmatpush2.msra.mxu0 0.0
    %1328 = vmatprep.subr.mxu0 0.0
    %1329 = vmatpush2.msra.mxu0 0.0
    %1330 = vmatprep.subr.mxu0 0.0
    %1331 = vmatpush2.msra.mxu0 0.0
    %1332 = vmatprep.subr.mxu0 0.0
    %1333 = vmatpush2.msra.mxu0 0.0
    %1334 = vmatprep.subr.mxu0 0.0
    %1335 = vmatpush2.msra.mxu0 0.0
    %1336 = vmatprep.subr.mxu0 0.0
    %1337 = vmatpush2.msra.mxu0 0.0
    %1338 = vmatprep.subr.mxu0 0.0
    %1339 = vmatpush2.msra.mxu0 0.0
    %1340 = vmatprep.subr.mxu0 0.0
    %1341 = vmatpush2.msra.mxu0 0.0
    %1342 = vmatprep.mubr.f32.mxu0 0.0
    %1343 = vmatmul.mubr.f32.gmra.mxu0 %v1116
    %v1344 = vpop.f32.mrf.mxu0
    %v1345 = vadd.f32 %v292, %v1344
    %v1346 = vpop.f32.mrf.mxu0
    %1347 = vdwg.mxu0
    %v1348 = vmul.f32 %v1266, %v1345
    %v1349 = vadd.f32 %v1277, %v1348
    %v1350 = vtanh.pop %v1349
    %v1351 = vsub.f32 %v1107, %v1350
    %v1352 = vmul.f32 %v1275, %v1351
    %v1353 = vadd.f32 %v1350, %v1352
    %vm1354 = vcmp.eq.s32.totalorder %v126, 4
    %v1355 = vsel %vm1354, 1, 0
    %1356 = vset.pattern.permute.xlu0 0
    %1357 = vperm.xlu0 %1356, %v1355
    %v1358 = vpop.permute.xlu0 %1357
    %vm1359 = vcmp.eq.s32.totalorder %v1358, 1
    %v1360 = vsel %vm1359, %v1353, %v1114
    %v1362 = vsel %vm127, %v1353, 0
    %1364 = vmatprep.subr.mxu0 0.0
    %1365 = vmatpush1.msra.mxu0 0.0
    %1366 = vmatprep.subr.mxu0 0.0
    %1367 = vmatpush1.msra.mxu0 0.0
    %1368 = vmatprep.subr.mxu0 0.0
    %1369 = vmatpush1.msra.mxu0 0.0
    %1370 = vmatprep.subr.mxu0 0.0
    %1371 = vmatpush1.msra.mxu0 0.0
    %1372 = vmatprep.subr.mxu0 0.0
    %1373 = vmatpush1.msra.mxu0 0.0
    %1374 = vmatprep.subr.mxu0 0.0
    %1375 = vmatpush1.msra.mxu0 0.0
    %1376 = vmatprep.subr.mxu0 0.0
    %1377 = vmatpush1.msra.mxu0 0.0
    %1378 = vmatprep.subr.mxu0 0.0
    %1379 = vmatpush1.msra.mxu0 0.0
    %1380 = vmatprep.subr.mxu0 0.0
    %1381 = vmatpush1.msra.mxu0 0.0
    %1382 = vmatprep.subr.mxu0 0.0
    %1383 = vmatpush1.msra.mxu0 0.0
    %1384 = vmatprep.subr.mxu0 0.0
    %1385 = vmatpush1.msra.mxu0 0.0
    %1386 = vmatprep.subr.mxu0 0.0
    %1387 = vmatpush1.msra.mxu0 0.0
    %1388 = vmatprep.subr.mxu0 0.0
    %1389 = vmatpush1.msra.mxu0 %v115
    %1390 = vmatprep.subr.mxu0 0.0
    %1391 = vmatpush1.msra.mxu0 %v114
    %1392 = vmatprep.subr.mxu0 0.0
    %1393 = vmatpush1.msra.mxu0 %v113
    %1394 = vmatprep.subr.mxu0 0.0
    %1395 = vmatpush1.msra.mxu0 %v112
    %1396 = vmatprep.subr.mxu0 0.0
    %1397 = vmatpush2.msra.mxu0 0.0
    %1398 = vmatprep.subr.mxu0 0.0
    %1399 = vmatpush2.msra.mxu0 0.0
    %1400 = vmatprep.subr.mxu0 0.0
    %1401 = vmatpush2.msra.mxu0 0.0
    %1402 = vmatprep.subr.mxu0 0.0
    %1403 = vmatpush2.msra.mxu0 0.0
    %1404 = vmatprep.subr.mxu0 0.0
    %1405 = vmatpush2.msra.mxu0 0.0
    %1406 = vmatprep.subr.mxu0 0.0
    %1407 = vmatpush2.msra.mxu0 0.0
    %1408 = vmatprep.subr.mxu0 0.0
    %1409 = vmatpush2.msra.mxu0 0.0
    %1410 = vmatprep.subr.mxu0 0.0
    %1411 = vmatpush2.msra.mxu0 0.0
    %1412 = vmatprep.subr.mxu0 0.0
    %1413 = vmatpush2.msra.mxu0 0.0
    %1414 = vmatprep.subr.mxu0 0.0
    %1415 = vmatpush2.msra.mxu0 0.0
    %1416 = vmatprep.subr.mxu0 0.0
    %1417 = vmatpush2.msra.mxu0 0.0
    %1418 = vmatprep.subr.mxu0 0.0
    %1419 = vmatpush2.msra.mxu0 0.0
    %1420 = vmatprep.subr.mxu0 0.0
    %1421 = vmatpush2.msra.mxu0 0.0
    %1422 = vmatprep.subr.mxu0 0.0
    %1423 = vmatpush2.msra.mxu0 0.0
    %1424 = vmatprep.subr.mxu0 0.0
    %1425 = vmatpush2.msra.mxu0 0.0
    %1426 = vmatprep.subr.mxu0 0.0
    %1427 = vmatpush2.msra.mxu0 0.0
    %1428 = vmatprep.mubr.f32.mxu0 0.0
    %1429 = vmatmul.mubr.f32.gmra.mxu0 %v1362
    %v1430 = vpop.f32.mrf.mxu0
    %v1431 = vadd.f32 0.0, %v1430
    %v1432 = vpop.f32.mrf.mxu0
    %1433 = vdwg.mxu0
    %1434 = vmatprep.subr.mxu0 0.0
    %1435 = vmatpush1.msra.mxu0 0.0
    %1436 = vmatprep.subr.mxu0 0.0
    %1437 = vmatpush1.msra.mxu0 0.0
    %1438 = vmatprep.subr.mxu0 0.0
    %1439 = vmatpush1.msra.mxu0 0.0
    %1440 = vmatprep.subr.mxu0 0.0
    %1441 = vmatpush1.msra.mxu0 0.0
    %1442 = vmatprep.subr.mxu0 0.0
    %1443 = vmatpush1.msra.mxu0 0.0
    %1444 = vmatprep.subr.mxu0 0.0
    %1445 = vmatpush1.msra.mxu0 0.0
    %1446 = vmatprep.subr.mxu0 0.0
    %1447 = vmatpush1.msra.mxu0 0.0
    %1448 = vmatprep.subr.mxu0 0.0
    %1449 = vmatpush1.msra.mxu0 0.0
    %1450 = vmatprep.subr.mxu0 0.0
    %1451 = vmatpush1.msra.mxu0 0.0
    %1452 = vmatprep.subr.mxu0 0.0
    %1453 = vmatpush1.msra.mxu0 0.0
    %1454 = vmatprep.subr.mxu0 0.0
    %1455 = vmatpush1.msra.mxu0 0.0
    %1456 = vmatprep.subr.mxu0 0.0
    %1457 = vmatpush1.msra.mxu0 0.0
    %1458 = vmatprep.subr.mxu0 0.0
    %1459 = vmatpush1.msra.mxu0 %v119
    %1460 = vmatprep.subr.mxu0 0.0
    %1461 = vmatpush1.msra.mxu0 %v118
    %1462 = vmatprep.subr.mxu0 0.0
    %1463 = vmatpush1.msra.mxu0 %v117
    %1464 = vmatprep.subr.mxu0 0.0
    %1465 = vmatpush1.msra.mxu0 %v116
    %1466 = vmatprep.subr.mxu0 0.0
    %1467 = vmatpush2.msra.mxu0 0.0
    %1468 = vmatprep.subr.mxu0 0.0
    %1469 = vmatpush2.msra.mxu0 0.0
    %1470 = vmatprep.subr.mxu0 0.0
    %1471 = vmatpush2.msra.mxu0 0.0
    %1472 = vmatprep.subr.mxu0 0.0
    %1473 = vmatpush2.msra.mxu0 0.0
    %1474 = vmatprep.subr.mxu0 0.0
    %1475 = vmatpush2.msra.mxu0 0.0
    %1476 = vmatprep.subr.mxu0 0.0
    %1477 = vmatpush2.msra.mxu0 0.0
    %1478 = vmatprep.subr.mxu0 0.0
    %1479 = vmatpush2.msra.mxu0 0.0
    %1480 = vmatprep.subr.mxu0 0.0
    %1481 = vmatpush2.msra.mxu0 0.0
    %1482 = vmatprep.subr.mxu0 0.0
    %1483 = vmatpush2.msra.mxu0 0.0
    %1484 = vmatprep.subr.mxu0 0.0
    %1485 = vmatpush2.msra.mxu0 0.0
    %1486 = vmatprep.subr.mxu0 0.0
    %1487 = vmatpush2.msra.mxu0 0.0
    %1488 = vmatprep.subr.mxu0 0.0
    %1489 = vmatpush2.msra.mxu0 0.0
    %1490 = vmatprep.subr.mxu0 0.0
    %1491 = vmatpush2.msra.mxu0 0.0
    %1492 = vmatprep.subr.mxu0 0.0
    %1493 = vmatpush2.msra.mxu0 0.0
    %1494 = vmatprep.subr.mxu0 0.0
    %1495 = vmatpush2.msra.mxu0 0.0
    %1496 = vmatprep.subr.mxu0 0.0
    %1497 = vmatpush2.msra.mxu0 0.0
    %1498 = vmatprep.mubr.f32.mxu0 0.0
    %1499 = vmatmul.mubr.f32.gmra.mxu0 %v1362
    %v1500 = vpop.f32.mrf.mxu0
    %v1501 = vadd.f32 0.0, %v1500
    %v1502 = vpop.f32.mrf.mxu0
    %1503 = vdwg.mxu0
    %s1504 = scalar_lea.vmem [#allocation2], 10
    %v1505 = vld [vmem:[%s1504] sm:$0x3]
    %v1506 = vadd.f32 %v1505, %v1431
    %v1507 = vxor.u32 %v1506, 2147483648
    %v1508 = vmul.f32 %v1507, 1.442695
    %v1509 = vpow.pop %v1508
    %v1510 = vadd.f32 %v1509, 1.0
    %v1511 = vrcp.pop %v1510
    %v1512 = vmul.f32 1.0, %v1511
    %s1513 = scalar_lea.vmem [#allocation5], 10
    %v1514 = vld [vmem:[%s1513] sm:$0x3]
    %v1515 = vadd.f32 %v1514, %v1501
    %v1516 = vxor.u32 %v1515, 2147483648
    %v1517 = vmul.f32 %v1516, 1.442695
    %v1518 = vpow.pop %v1517
    %v1519 = vadd.f32 %v1518, 1.0
    %v1520 = vrcp.pop %v1519
    %v1521 = vmul.f32 1.0, %v1520
    %s1522 = scalar_lea.vmem [#allocation7], 10
    %v1523 = vld [vmem:[%s1522] sm:$0x3]
    %1524 = vmatprep.subr.mxu0 0.0
    %1525 = vmatpush1.msra.mxu0 0.0
    %1526 = vmatprep.subr.mxu0 0.0
    %1527 = vmatpush1.msra.mxu0 0.0
    %1528 = vmatprep.subr.mxu0 0.0
    %1529 = vmatpush1.msra.mxu0 0.0
    %1530 = vmatprep.subr.mxu0 0.0
    %1531 = vmatpush1.msra.mxu0 0.0
    %1532 = vmatprep.subr.mxu0 0.0
    %1533 = vmatpush1.msra.mxu0 0.0
    %1534 = vmatprep.subr.mxu0 0.0
    %1535 = vmatpush1.msra.mxu0 0.0
    %1536 = vmatprep.subr.mxu0 0.0
    %1537 = vmatpush1.msra.mxu0 0.0
    %1538 = vmatprep.subr.mxu0 0.0
    %1539 = vmatpush1.msra.mxu0 0.0
    %1540 = vmatprep.subr.mxu0 0.0
    %1541 = vmatpush1.msra.mxu0 0.0
    %1542 = vmatprep.subr.mxu0 0.0
    %1543 = vmatpush1.msra.mxu0 0.0
    %1544 = vmatprep.subr.mxu0 0.0
    %1545 = vmatpush1.msra.mxu0 0.0
    %1546 = vmatprep.subr.mxu0 0.0
    %1547 = vmatpush1.msra.mxu0 0.0
    %1548 = vmatprep.subr.mxu0 0.0
    %1549 = vmatpush1.msra.mxu0 %v123
    %1550 = vmatprep.subr.mxu0 0.0
    %1551 = vmatpush1.msra.mxu0 %v122
    %1552 = vmatprep.subr.mxu0 0.0
    %1553 = vmatpush1.msra.mxu0 %v121
    %1554 = vmatprep.subr.mxu0 0.0
    %1555 = vmatpush1.msra.mxu0 %v120
    %1556 = vmatprep.subr.mxu0 0.0
    %1557 = vmatpush2.msra.mxu0 0.0
    %1558 = vmatprep.subr.mxu0 0.0
    %1559 = vmatpush2.msra.mxu0 0.0
    %1560 = vmatprep.subr.mxu0 0.0
    %1561 = vmatpush2.msra.mxu0 0.0
    %1562 = vmatprep.subr.mxu0 0.0
    %1563 = vmatpush2.msra.mxu0 0.0
    %1564 = vmatprep.subr.mxu0 0.0
    %1565 = vmatpush2.msra.mxu0 0.0
    %1566 = vmatprep.subr.mxu0 0.0
    %1567 = vmatpush2.msra.mxu0 0.0
    %1568 = vmatprep.subr.mxu0 0.0
    %1569 = vmatpush2.msra.mxu0 0.0
    %1570 = vmatprep.subr.mxu0 0.0
    %1571 = vmatpush2.msra.mxu0 0.0
    %1572 = vmatprep.subr.mxu0 0.0
    %1573 = vmatpush2.msra.mxu0 0.0
    %1574 = vmatprep.subr.mxu0 0.0
    %1575 = vmatpush2.msra.mxu0 0.0
    %1576 = vmatprep.subr.mxu0 0.0
    %1577 = vmatpush2.msra.mxu0 0.0
    %1578 = vmatprep.subr.mxu0 0.0
    %1579 = vmatpush2.msra.mxu0 0.0
    %1580 = vmatprep.subr.mxu0 0.0
    %1581 = vmatpush2.msra.mxu0 0.0
    %1582 = vmatprep.subr.mxu0 0.0
    %1583 = vmatpush2.msra.mxu0 0.0
    %1584 = vmatprep.subr.mxu0 0.0
    %1585 = vmatpush2.msra.mxu0 0.0
    %1586 = vmatprep.subr.mxu0 0.0
    %1587 = vmatpush2.msra.mxu0 0.0
    %1588 = vmatprep.mubr.f32.mxu0 0.0
    %1589 = vmatmul.mubr.f32.gmra.mxu0 %v1362
    %v1590 = vpop.f32.mrf.mxu0
    %v1591 = vadd.f32 %v292, %v1590
    %v1592 = vpop.f32.mrf.mxu0
    %1593 = vdwg.mxu0
    %v1594 = vmul.f32 %v1512, %v1591
    %v1595 = vadd.f32 %v1523, %v1594
    %v1596 = vtanh.pop %v1595
    %v1597 = vsub.f32 %v1353, %v1596
    %v1598 = vmul.f32 %v1521, %v1597
    %v1599 = vadd.f32 %v1596, %v1598
    %vm1600 = vcmp.eq.s32.totalorder %v126, 5
    %v1601 = vsel %vm1600, 1, 0
    %1602 = vset.pattern.permute.xlu0 0
    %1603 = vperm.xlu0 %1602, %v1601
    %v1604 = vpop.permute.xlu0 %1603
    %vm1605 = vcmp.eq.s32.totalorder %v1604, 1
    %v1606 = vsel %vm1605, %v1599, %v1360
    %v1608 = vsel %vm127, %v1599, 0
    %1610 = vmatprep.subr.mxu0 0.0
    %1611 = vmatpush1.msra.mxu0 0.0
    %1612 = vmatprep.subr.mxu0 0.0
    %1613 = vmatpush1.msra.mxu0 0.0
    %1614 = vmatprep.subr.mxu0 0.0
    %1615 = vmatpush1.msra.mxu0 0.0
    %1616 = vmatprep.subr.mxu0 0.0
    %1617 = vmatpush1.msra.mxu0 0.0
    %1618 = vmatprep.subr.mxu0 0.0
    %1619 = vmatpush1.msra.mxu0 0.0
    %1620 = vmatprep.subr.mxu0 0.0
    %1621 = vmatpush1.msra.mxu0 0.0
    %1622 = vmatprep.subr.mxu0 0.0
    %1623 = vmatpush1.msra.mxu0 0.0
    %1624 = vmatprep.subr.mxu0 0.0
    %1625 = vmatpush1.msra.mxu0 0.0
    %1626 = vmatprep.subr.mxu0 0.0
    %1627 = vmatpush1.msra.mxu0 0.0
    %1628 = vmatprep.subr.mxu0 0.0
    %1629 = vmatpush1.msra.mxu0 0.0
    %1630 = vmatprep.subr.mxu0 0.0
    %1631 = vmatpush1.msra.mxu0 0.0
    %1632 = vmatprep.subr.mxu0 0.0
    %1633 = vmatpush1.msra.mxu0 0.0
    %1634 = vmatprep.subr.mxu0 0.0
    %1635 = vmatpush1.msra.mxu0 %v115
    %1636 = vmatprep.subr.mxu0 0.0
    %1637 = vmatpush1.msra.mxu0 %v114
    %1638 = vmatprep.subr.mxu0 0.0
    %1639 = vmatpush1.msra.mxu0 %v113
    %1640 = vmatprep.subr.mxu0 0.0
    %1641 = vmatpush1.msra.mxu0 %v112
    %1642 = vmatprep.subr.mxu0 0.0
    %1643 = vmatpush2.msra.mxu0 0.0
    %1644 = vmatprep.subr.mxu0 0.0
    %1645 = vmatpush2.msra.mxu0 0.0
    %1646 = vmatprep.subr.mxu0 0.0
    %1647 = vmatpush2.msra.mxu0 0.0
    %1648 = vmatprep.subr.mxu0 0.0
    %1649 = vmatpush2.msra.mxu0 0.0
    %1650 = vmatprep.subr.mxu0 0.0
    %1651 = vmatpush2.msra.mxu0 0.0
    %1652 = vmatprep.subr.mxu0 0.0
    %1653 = vmatpush2.msra.mxu0 0.0
    %1654 = vmatprep.subr.mxu0 0.0
    %1655 = vmatpush2.msra.mxu0 0.0
    %1656 = vmatprep.subr.mxu0 0.0
    %1657 = vmatpush2.msra.mxu0 0.0
    %1658 = vmatprep.subr.mxu0 0.0
    %1659 = vmatpush2.msra.mxu0 0.0
    %1660 = vmatprep.subr.mxu0 0.0
    %1661 = vmatpush2.msra.mxu0 0.0
    %1662 = vmatprep.subr.mxu0 0.0
    %1663 = vmatpush2.msra.mxu0 0.0
    %1664 = vmatprep.subr.mxu0 0.0
    %1665 = vmatpush2.msra.mxu0 0.0
    %1666 = vmatprep.subr.mxu0 0.0
    %1667 = vmatpush2.msra.mxu0 0.0
    %1668 = vmatprep.subr.mxu0 0.0
    %1669 = vmatpush2.msra.mxu0 0.0
    %1670 = vmatprep.subr.mxu0 0.0
    %1671 = vmatpush2.msra.mxu0 0.0
    %1672 = vmatprep.subr.mxu0 0.0
    %1673 = vmatpush2.msra.mxu0 0.0
    %1674 = vmatprep.mubr.f32.mxu0 0.0
    %1675 = vmatmul.mubr.f32.gmra.mxu0 %v1608
    %v1676 = vpop.f32.mrf.mxu0
    %v1677 = vadd.f32 0.0, %v1676
    %v1678 = vpop.f32.mrf.mxu0
    %1679 = vdwg.mxu0
    %1680 = vmatprep.subr.mxu0 0.0
    %1681 = vmatpush1.msra.mxu0 0.0
    %1682 = vmatprep.subr.mxu0 0.0
    %1683 = vmatpush1.msra.mxu0 0.0
    %1684 = vmatprep.subr.mxu0 0.0
    %1685 = vmatpush1.msra.mxu0 0.0
    %1686 = vmatprep.subr.mxu0 0.0
    %1687 = vmatpush1.msra.mxu0 0.0
    %1688 = vmatprep.subr.mxu0 0.0
    %1689 = vmatpush1.msra.mxu0 0.0
    %1690 = vmatprep.subr.mxu0 0.0
    %1691 = vmatpush1.msra.mxu0 0.0
    %1692 = vmatprep.subr.mxu0 0.0
    %1693 = vmatpush1.msra.mxu0 0.0
    %1694 = vmatprep.subr.mxu0 0.0
    %1695 = vmatpush1.msra.mxu0 0.0
    %1696 = vmatprep.subr.mxu0 0.0
    %1697 = vmatpush1.msra.mxu0 0.0
    %1698 = vmatprep.subr.mxu0 0.0
    %1699 = vmatpush1.msra.mxu0 0.0
    %1700 = vmatprep.subr.mxu0 0.0
    %1701 = vmatpush1.msra.mxu0 0.0
    %1702 = vmatprep.subr.mxu0 0.0
    %1703 = vmatpush1.msra.mxu0 0.0
    %1704 = vmatprep.subr.mxu0 0.0
    %1705 = vmatpush1.msra.mxu0 %v119
    %1706 = vmatprep.subr.mxu0 0.0
    %1707 = vmatpush1.msra.mxu0 %v118
    %1708 = vmatprep.subr.mxu0 0.0
    %1709 = vmatpush1.msra.mxu0 %v117
    %1710 = vmatprep.subr.mxu0 0.0
    %1711 = vmatpush1.msra.mxu0 %v116
    %1712 = vmatprep.subr.mxu0 0.0
    %1713 = vmatpush2.msra.mxu0 0.0
    %1714 = vmatprep.subr.mxu0 0.0
    %1715 = vmatpush2.msra.mxu0 0.0
    %1716 = vmatprep.subr.mxu0 0.0
    %1717 = vmatpush2.msra.mxu0 0.0
    %1718 = vmatprep.subr.mxu0 0.0
    %1719 = vmatpush2.msra.mxu0 0.0
    %1720 = vmatprep.subr.mxu0 0.0
    %1721 = vmatpush2.msra.mxu0 0.0
    %1722 = vmatprep.subr.mxu0 0.0
    %1723 = vmatpush2.msra.mxu0 0.0
    %1724 = vmatprep.subr.mxu0 0.0
    %1725 = vmatpush2.msra.mxu0 0.0
    %1726 = vmatprep.subr.mxu0 0.0
    %1727 = vmatpush2.msra.mxu0 0.0
    %1728 = vmatprep.subr.mxu0 0.0
    %1729 = vmatpush2.msra.mxu0 0.0
    %1730 = vmatprep.subr.mxu0 0.0
    %1731 = vmatpush2.msra.mxu0 0.0
    %1732 = vmatprep.subr.mxu0 0.0
    %1733 = vmatpush2.msra.mxu0 0.0
    %1734 = vmatprep.subr.mxu0 0.0
    %1735 = vmatpush2.msra.mxu0 0.0
    %1736 = vmatprep.subr.mxu0 0.0
    %1737 = vmatpush2.msra.mxu0 0.0
    %1738 = vmatprep.subr.mxu0 0.0
    %1739 = vmatpush2.msra.mxu0 0.0
    %1740 = vmatprep.subr.mxu0 0.0
    %1741 = vmatpush2.msra.mxu0 0.0
    %1742 = vmatprep.subr.mxu0 0.0
    %1743 = vmatpush2.msra.mxu0 0.0
    %1744 = vmatprep.mubr.f32.mxu0 0.0
    %1745 = vmatmul.mubr.f32.gmra.mxu0 %v1608
    %v1746 = vpop.f32.mrf.mxu0
    %v1747 = vadd.f32 0.0, %v1746
    %v1748 = vpop.f32.mrf.mxu0
    %1749 = vdwg.mxu0
    %s1750 = scalar_lea.vmem [#allocation2], 12
    %v1751 = vld [vmem:[%s1750] sm:$0x3]
    %v1752 = vadd.f32 %v1751, %v1677
    %v1753 = vxor.u32 %v1752, 2147483648
    %v1754 = vmul.f32 %v1753, 1.442695
    %v1755 = vpow.pop %v1754
    %v1756 = vadd.f32 %v1755, 1.0
    %v1757 = vrcp.pop %v1756
    %v1758 = vmul.f32 1.0, %v1757
    %s1759 = scalar_lea.vmem [#allocation5], 12
    %v1760 = vld [vmem:[%s1759] sm:$0x3]
    %v1761 = vadd.f32 %v1760, %v1747
    %v1762 = vxor.u32 %v1761, 2147483648
    %v1763 = vmul.f32 %v1762, 1.442695
    %v1764 = vpow.pop %v1763
    %v1765 = vadd.f32 %v1764, 1.0
    %v1766 = vrcp.pop %v1765
    %v1767 = vmul.f32 1.0, %v1766
    %s1768 = scalar_lea.vmem [#allocation7], 12
    %v1769 = vld [vmem:[%s1768] sm:$0x3]
    %1770 = vmatprep.subr.mxu0 0.0
    %1771 = vmatpush1.msra.mxu0 0.0
    %1772 = vmatprep.subr.mxu0 0.0
    %1773 = vmatpush1.msra.mxu0 0.0
    %1774 = vmatprep.subr.mxu0 0.0
    %1775 = vmatpush1.msra.mxu0 0.0
    %1776 = vmatprep.subr.mxu0 0.0
    %1777 = vmatpush1.msra.mxu0 0.0
    %1778 = vmatprep.subr.mxu0 0.0
    %1779 = vmatpush1.msra.mxu0 0.0
    %1780 = vmatprep.subr.mxu0 0.0
    %1781 = vmatpush1.msra.mxu0 0.0
    %1782 = vmatprep.subr.mxu0 0.0
    %1783 = vmatpush1.msra.mxu0 0.0
    %1784 = vmatprep.subr.mxu0 0.0
    %1785 = vmatpush1.msra.mxu0 0.0
    %1786 = vmatprep.subr.mxu0 0.0
    %1787 = vmatpush1.msra.mxu0 0.0
    %1788 = vmatprep.subr.mxu0 0.0
    %1789 = vmatpush1.msra.mxu0 0.0
    %1790 = vmatprep.subr.mxu0 0.0
    %1791 = vmatpush1.msra.mxu0 0.0
    %1792 = vmatprep.subr.mxu0 0.0
    %1793 = vmatpush1.msra.mxu0 0.0
    %1794 = vmatprep.subr.mxu0 0.0
    %1795 = vmatpush1.msra.mxu0 %v123
    %1796 = vmatprep.subr.mxu0 0.0
    %1797 = vmatpush1.msra.mxu0 %v122
    %1798 = vmatprep.subr.mxu0 0.0
    %1799 = vmatpush1.msra.mxu0 %v121
    %1800 = vmatprep.subr.mxu0 0.0
    %1801 = vmatpush1.msra.mxu0 %v120
    %1802 = vmatprep.subr.mxu0 0.0
    %1803 = vmatpush2.msra.mxu0 0.0
    %1804 = vmatprep.subr.mxu0 0.0
    %1805 = vmatpush2.msra.mxu0 0.0
    %1806 = vmatprep.subr.mxu0 0.0
    %1807 = vmatpush2.msra.mxu0 0.0
    %1808 = vmatprep.subr.mxu0 0.0
    %1809 = vmatpush2.msra.mxu0 0.0
    %1810 = vmatprep.subr.mxu0 0.0
    %1811 = vmatpush2.msra.mxu0 0.0
    %1812 = vmatprep.subr.mxu0 0.0
    %1813 = vmatpush2.msra.mxu0 0.0
    %1814 = vmatprep.subr.mxu0 0.0
    %1815 = vmatpush2.msra.mxu0 0.0
    %1816 = vmatprep.subr.mxu0 0.0
    %1817 = vmatpush2.msra.mxu0 0.0
    %1818 = vmatprep.subr.mxu0 0.0
    %1819 = vmatpush2.msra.mxu0 0.0
    %1820 = vmatprep.subr.mxu0 0.0
    %1821 = vmatpush2.msra.mxu0 0.0
    %1822 = vmatprep.subr.mxu0 0.0
    %1823 = vmatpush2.msra.mxu0 0.0
    %1824 = vmatprep.subr.mxu0 0.0
    %1825 = vmatpush2.msra.mxu0 0.0
    %1826 = vmatprep.subr.mxu0 0.0
    %1827 = vmatpush2.msra.mxu0 0.0
    %1828 = vmatprep.subr.mxu0 0.0
    %1829 = vmatpush2.msra.mxu0 0.0
    %1830 = vmatprep.subr.mxu0 0.0
    %1831 = vmatpush2.msra.mxu0 0.0
    %1832 = vmatprep.subr.mxu0 0.0
    %1833 = vmatpush2.msra.mxu0 0.0
    %1834 = vmatprep.mubr.f32.mxu0 0.0
    %1835 = vmatmul.mubr.f32.gmra.mxu0 %v1608
    %v1836 = vpop.f32.mrf.mxu0
    %v1837 = vadd.f32 %v292, %v1836
    %v1838 = vpop.f32.mrf.mxu0
    %1839 = vdwg.mxu0
    %v1840 = vmul.f32 %v1758, %v1837
    %v1841 = vadd.f32 %v1769, %v1840
    %v1842 = vtanh.pop %v1841
    %v1843 = vsub.f32 %v1599, %v1842
    %v1844 = vmul.f32 %v1767, %v1843
    %v1845 = vadd.f32 %v1842, %v1844
    %vm1846 = vcmp.eq.s32.totalorder %v126, 6
    %v1847 = vsel %vm1846, 1, 0
    %1848 = vset.pattern.permute.xlu0 0
    %1849 = vperm.xlu0 %1848, %v1847
    %v1850 = vpop.permute.xlu0 %1849
    %vm1851 = vcmp.eq.s32.totalorder %v1850, 1
    %v1852 = vsel %vm1851, %v1845, %v1606
    %v1854 = vsel %vm127, %v1845, 0
    %1856 = vmatprep.subr.mxu0 0.0
    %1857 = vmatpush1.msra.mxu0 0.0
    %1858 = vmatprep.subr.mxu0 0.0
    %1859 = vmatpush1.msra.mxu0 0.0
    %1860 = vmatprep.subr.mxu0 0.0
    %1861 = vmatpush1.msra.mxu0 0.0
    %1862 = vmatprep.subr.mxu0 0.0
    %1863 = vmatpush1.msra.mxu0 0.0
    %1864 = vmatprep.subr.mxu0 0.0
    %1865 = vmatpush1.msra.mxu0 0.0
    %1866 = vmatprep.subr.mxu0 0.0
    %1867 = vmatpush1.msra.mxu0 0.0
    %1868 = vmatprep.subr.mxu0 0.0
    %1869 = vmatpush1.msra.mxu0 0.0
    %1870 = vmatprep.subr.mxu0 0.0
    %1871 = vmatpush1.msra.mxu0 0.0
    %1872 = vmatprep.subr.mxu0 0.0
    %1873 = vmatpush1.msra.mxu0 0.0
    %1874 = vmatprep.subr.mxu0 0.0
    %1875 = vmatpush1.msra.mxu0 0.0
    %1876 = vmatprep.subr.mxu0 0.0
    %1877 = vmatpush1.msra.mxu0 0.0
    %1878 = vmatprep.subr.mxu0 0.0
    %1879 = vmatpush1.msra.mxu0 0.0
    %1880 = vmatprep.subr.mxu0 0.0
    %1881 = vmatpush1.msra.mxu0 %v115
    %1882 = vmatprep.subr.mxu0 0.0
    %1883 = vmatpush1.msra.mxu0 %v114
    %1884 = vmatprep.subr.mxu0 0.0
    %1885 = vmatpush1.msra.mxu0 %v113
    %1886 = vmatprep.subr.mxu0 0.0
    %1887 = vmatpush1.msra.mxu0 %v112
    %1888 = vmatprep.subr.mxu0 0.0
    %1889 = vmatpush2.msra.mxu0 0.0
    %1890 = vmatprep.subr.mxu0 0.0
    %1891 = vmatpush2.msra.mxu0 0.0
    %1892 = vmatprep.subr.mxu0 0.0
    %1893 = vmatpush2.msra.mxu0 0.0
    %1894 = vmatprep.subr.mxu0 0.0
    %1895 = vmatpush2.msra.mxu0 0.0
    %1896 = vmatprep.subr.mxu0 0.0
    %1897 = vmatpush2.msra.mxu0 0.0
    %1898 = vmatprep.subr.mxu0 0.0
    %1899 = vmatpush2.msra.mxu0 0.0
    %1900 = vmatprep.subr.mxu0 0.0
    %1901 = vmatpush2.msra.mxu0 0.0
    %1902 = vmatprep.subr.mxu0 0.0
    %1903 = vmatpush2.msra.mxu0 0.0
    %1904 = vmatprep.subr.mxu0 0.0
    %1905 = vmatpush2.msra.mxu0 0.0
    %1906 = vmatprep.subr.mxu0 0.0
    %1907 = vmatpush2.msra.mxu0 0.0
    %1908 = vmatprep.subr.mxu0 0.0
    %1909 = vmatpush2.msra.mxu0 0.0
    %1910 = vmatprep.subr.mxu0 0.0
    %1911 = vmatpush2.msra.mxu0 0.0
    %1912 = vmatprep.subr.mxu0 0.0
    %1913 = vmatpush2.msra.mxu0 0.0
    %1914 = vmatprep.subr.mxu0 0.0
    %1915 = vmatpush2.msra.mxu0 0.0
    %1916 = vmatprep.subr.mxu0 0.0
    %1917 = vmatpush2.msra.mxu0 0.0
    %1918 = vmatprep.subr.mxu0 0.0
    %1919 = vmatpush2.msra.mxu0 0.0
    %1920 = vmatprep.mubr.f32.mxu0 0.0
    %1921 = vmatmul.mubr.f32.gmra.mxu0 %v1854
    %v1922 = vpop.f32.mrf.mxu0
    %v1923 = vadd.f32 0.0, %v1922
    %v1924 = vpop.f32.mrf.mxu0
    %1925 = vdwg.mxu0
    %1926 = vmatprep.subr.mxu0 0.0
    %1927 = vmatpush1.msra.mxu0 0.0
    %1928 = vmatprep.subr.mxu0 0.0
    %1929 = vmatpush1.msra.mxu0 0.0
    %1930 = vmatprep.subr.mxu0 0.0
    %1931 = vmatpush1.msra.mxu0 0.0
    %1932 = vmatprep.subr.mxu0 0.0
    %1933 = vmatpush1.msra.mxu0 0.0
    %1934 = vmatprep.subr.mxu0 0.0
    %1935 = vmatpush1.msra.mxu0 0.0
    %1936 = vmatprep.subr.mxu0 0.0
    %1937 = vmatpush1.msra.mxu0 0.0
    %1938 = vmatprep.subr.mxu0 0.0
    %1939 = vmatpush1.msra.mxu0 0.0
    %1940 = vmatprep.subr.mxu0 0.0
    %1941 = vmatpush1.msra.mxu0 0.0
    %1942 = vmatprep.subr.mxu0 0.0
    %1943 = vmatpush1.msra.mxu0 0.0
    %1944 = vmatprep.subr.mxu0 0.0
    %1945 = vmatpush1.msra.mxu0 0.0
    %1946 = vmatprep.subr.mxu0 0.0
    %1947 = vmatpush1.msra.mxu0 0.0
    %1948 = vmatprep.subr.mxu0 0.0
    %1949 = vmatpush1.msra.mxu0 0.0
    %1950 = vmatprep.subr.mxu0 0.0
    %1951 = vmatpush1.msra.mxu0 %v119
    %1952 = vmatprep.subr.mxu0 0.0
    %1953 = vmatpush1.msra.mxu0 %v118
    %1954 = vmatprep.subr.mxu0 0.0
    %1955 = vmatpush1.msra.mxu0 %v117
    %1956 = vmatprep.subr.mxu0 0.0
    %1957 = vmatpush1.msra.mxu0 %v116
    %1958 = vmatprep.subr.mxu0 0.0
    %1959 = vmatpush2.msra.mxu0 0.0
    %1960 = vmatprep.subr.mxu0 0.0
    %1961 = vmatpush2.msra.mxu0 0.0
    %1962 = vmatprep.subr.mxu0 0.0
    %1963 = vmatpush2.msra.mxu0 0.0
    %1964 = vmatprep.subr.mxu0 0.0
    %1965 = vmatpush2.msra.mxu0 0.0
    %1966 = vmatprep.subr.mxu0 0.0
    %1967 = vmatpush2.msra.mxu0 0.0
    %1968 = vmatprep.subr.mxu0 0.0
    %1969 = vmatpush2.msra.mxu0 0.0
    %1970 = vmatprep.subr.mxu0 0.0
    %1971 = vmatpush2.msra.mxu0 0.0
    %1972 = vmatprep.subr.mxu0 0.0
    %1973 = vmatpush2.msra.mxu0 0.0
    %1974 = vmatprep.subr.mxu0 0.0
    %1975 = vmatpush2.msra.mxu0 0.0
    %1976 = vmatprep.subr.mxu0 0.0
    %1977 = vmatpush2.msra.mxu0 0.0
    %1978 = vmatprep.subr.mxu0 0.0
    %1979 = vmatpush2.msra.mxu0 0.0
    %1980 = vmatprep.subr.mxu0 0.0
    %1981 = vmatpush2.msra.mxu0 0.0
    %1982 = vmatprep.subr.mxu0 0.0
    %1983 = vmatpush2.msra.mxu0 0.0
    %1984 = vmatprep.subr.mxu0 0.0
    %1985 = vmatpush2.msra.mxu0 0.0
    %1986 = vmatprep.subr.mxu0 0.0
    %1987 = vmatpush2.msra.mxu0 0.0
    %1988 = vmatprep.subr.mxu0 0.0
    %1989 = vmatpush2.msra.mxu0 0.0
    %1990 = vmatprep.mubr.f32.mxu0 0.0
    %1991 = vmatmul.mubr.f32.gmra.mxu0 %v1854
    %v1992 = vpop.f32.mrf.mxu0
    %v1993 = vadd.f32 0.0, %v1992
    %v1994 = vpop.f32.mrf.mxu0
    %1995 = vdwg.mxu0
    %s1996 = scalar_lea.vmem [#allocation2], 14
    %v1997 = vld [vmem:[%s1996] sm:$0x3]
    %v1998 = vadd.f32 %v1997, %v1923
    %v1999 = vxor.u32 %v1998, 2147483648
    %v2000 = vmul.f32 %v1999, 1.442695
    %v2001 = vpow.pop %v2000
    %v2002 = vadd.f32 %v2001, 1.0
    %v2003 = vrcp.pop %v2002
    %v2004 = vmul.f32 1.0, %v2003
    %s2005 = scalar_lea.vmem [#allocation5], 14
    %v2006 = vld [vmem:[%s2005] sm:$0x3]
    %v2007 = vadd.f32 %v2006, %v1993
    %v2008 = vxor.u32 %v2007, 2147483648
    %v2009 = vmul.f32 %v2008, 1.442695
    %v2010 = vpow.pop %v2009
    %v2011 = vadd.f32 %v2010, 1.0
    %v2012 = vrcp.pop %v2011
    %v2013 = vmul.f32 1.0, %v2012
    %s2014 = scalar_lea.vmem [#allocation7], 14
    %v2015 = vld [vmem:[%s2014] sm:$0x3]
    %2016 = vmatprep.subr.mxu0 0.0
    %2017 = vmatpush1.msra.mxu0 0.0
    %2018 = vmatprep.subr.mxu0 0.0
    %2019 = vmatpush1.msra.mxu0 0.0
    %2020 = vmatprep.subr.mxu0 0.0
    %2021 = vmatpush1.msra.mxu0 0.0
    %2022 = vmatprep.subr.mxu0 0.0
    %2023 = vmatpush1.msra.mxu0 0.0
    %2024 = vmatprep.subr.mxu0 0.0
    %2025 = vmatpush1.msra.mxu0 0.0
    %2026 = vmatprep.subr.mxu0 0.0
    %2027 = vmatpush1.msra.mxu0 0.0
    %2028 = vmatprep.subr.mxu0 0.0
    %2029 = vmatpush1.msra.mxu0 0.0
    %2030 = vmatprep.subr.mxu0 0.0
    %2031 = vmatpush1.msra.mxu0 0.0
    %2032 = vmatprep.subr.mxu0 0.0
    %2033 = vmatpush1.msra.mxu0 0.0
    %2034 = vmatprep.subr.mxu0 0.0
    %2035 = vmatpush1.msra.mxu0 0.0
    %2036 = vmatprep.subr.mxu0 0.0
    %2037 = vmatpush1.msra.mxu0 0.0
    %2038 = vmatprep.subr.mxu0 0.0
    %2039 = vmatpush1.msra.mxu0 0.0
    %2040 = vmatprep.subr.mxu0 0.0
    %2041 = vmatpush1.msra.mxu0 %v123
    %2042 = vmatprep.subr.mxu0 0.0
    %2043 = vmatpush1.msra.mxu0 %v122
    %2044 = vmatprep.subr.mxu0 0.0
    %2045 = vmatpush1.msra.mxu0 %v121
    %2046 = vmatprep.subr.mxu0 0.0
    %2047 = vmatpush1.msra.mxu0 %v120
    %2048 = vmatprep.subr.mxu0 0.0
    %2049 = vmatpush2.msra.mxu0 0.0
    %2050 = vmatprep.subr.mxu0 0.0
    %2051 = vmatpush2.msra.mxu0 0.0
    %2052 = vmatprep.subr.mxu0 0.0
    %2053 = vmatpush2.msra.mxu0 0.0
    %2054 = vmatprep.subr.mxu0 0.0
    %2055 = vmatpush2.msra.mxu0 0.0
    %2056 = vmatprep.subr.mxu0 0.0
    %2057 = vmatpush2.msra.mxu0 0.0
    %2058 = vmatprep.subr.mxu0 0.0
    %2059 = vmatpush2.msra.mxu0 0.0
    %2060 = vmatprep.subr.mxu0 0.0
    %2061 = vmatpush2.msra.mxu0 0.0
    %2062 = vmatprep.subr.mxu0 0.0
    %2063 = vmatpush2.msra.mxu0 0.0
    %2064 = vmatprep.subr.mxu0 0.0
    %2065 = vmatpush2.msra.mxu0 0.0
    %2066 = vmatprep.subr.mxu0 0.0
    %2067 = vmatpush2.msra.mxu0 0.0
    %2068 = vmatprep.subr.mxu0 0.0
    %2069 = vmatpush2.msra.mxu0 0.0
    %2070 = vmatprep.subr.mxu0 0.0
    %2071 = vmatpush2.msra.mxu0 0.0
    %2072 = vmatprep.subr.mxu0 0.0
    %2073 = vmatpush2.msra.mxu0 0.0
    %2074 = vmatprep.subr.mxu0 0.0
    %2075 = vmatpush2.msra.mxu0 0.0
    %2076 = vmatprep.subr.mxu0 0.0
    %2077 = vmatpush2.msra.mxu0 0.0
    %2078 = vmatprep.subr.mxu0 0.0
    %2079 = vmatpush2.msra.mxu0 0.0
    %2080 = vmatprep.mubr.f32.mxu0 0.0
    %2081 = vmatmul.mubr.f32.gmra.mxu0 %v1854
    %v2082 = vpop.f32.mrf.mxu0
    %v2083 = vadd.f32 %v292, %v2082
    %v2084 = vpop.f32.mrf.mxu0
    %2085 = vdwg.mxu0
    %v2086 = vmul.f32 %v2004, %v2083
    %v2087 = vadd.f32 %v2015, %v2086
    %v2088 = vtanh.pop %v2087
    %v2089 = vsub.f32 %v1845, %v2088
    %v2090 = vmul.f32 %v2013, %v2089
    %v2091 = vadd.f32 %v2088, %v2090
    %vm2092 = vcmp.eq.s32.totalorder %v126, 7
    %v2093 = vsel %vm2092, 1, 0
    %2094 = vset.pattern.permute.xlu0 0
    %2095 = vperm.xlu0 %2094, %v2093
    %v2096 = vpop.permute.xlu0 %2095
    %vm2097 = vcmp.eq.s32.totalorder %v2096, 1
    %v2098 = vsel %vm2097, %v2091, %v1852
    %vm2099 = vcmask 254976
    %2100 = vst.msk [vmem:[#allocation13] sm:$0x3] %vm2099, %v2098
    // Predicated region
    $region58: #{tpu_custom_call.1} parent=1 // pred_check
      _
    $region59: #{tpu_custom_call.1} parent=1 // pred_check_branch
      %2102 = sbr.rel (0) target = $region61
    $region60: #{tpu_custom_call.1} parent=1 // pred_region
      %s2104 = ssub.s32 32, 32
      %2105 = vsyncadd [#allocation4], %s2104
      %s2107 = sshll.u32 [#allocation13], 4
      %s2108 = int_to_ptr.vmem [resolvable:$true] %s2107
      %2110 = dma.vmem_to_hbm [thread:$0]  %s2108, 32, %s8, [#allocation4]
    $region61: #{tpu_custom_call.1} parent=1 // pred_fallthru
      _
    // Predicated region
    $region62: #{tpu_custom_call.1} parent=1 // pred_check
      _
    $region63: #{tpu_custom_call.1} parent=1 // pred_check_branch
      %2112 = sbr.rel (0) target = $region65
    $region64: #{tpu_custom_call.1} parent=1 // pred_region
      %2113 = dma.done [#allocation4], 32
    $region65: #{tpu_custom_call.1} parent=1 // pred_fallthru
      _
    %2114 = vsyncpa [#allocation3], 1
    %2115 = vsyncpa [#allocation6], 1
    %2116 = vsyncpa [#allocation9], 1
    %2117 = vsyncpa [#allocation12], 1
    %2118 = vsyncpa [#allocation4], 1

</llo_original>
